<compile_context>
chip_gen: v7x
topology: tpu7x:2x2x1
jax: 0.10.0
libtpu: 0.0.40
codegen_flags: <defaults>
</compile_context>

<pallas_src>
import jax
import jax.numpy as jnp
from jax.experimental import pallas as pl
from jax.experimental.pallas import tpu as pltpu

B_QUANT = 64.0        # global "B" used by tinykg in the reference code
C_PAD = 128           # lane-dense padded class dimension (7 -> 128)
NEG_BIG = -1e30       # logit value for padded class columns


def _round_up(v, m):
    return ((v + m - 1) // m) * m


def _vmem_limit(*block_bytes):
    # size the scoped VMEM request to actual usage (double-buffered) + headroom,
    # capped well below a v7x core's 64 MiB physical VMEM.
    est = 2 * int(sum(block_bytes)) + (4 << 20)
    return int(min(max(est, 8 << 20), 48 << 20))


# ----------------------------- in-kernel helpers -----------------------------

def _uniform01(seed, row_off, shape, salt):
    """Counter-based hash PRNG -> uniform [0, 1) f32 (portable: plain jnp ops)."""
    r = (jax.lax.broadcasted_iota(jnp.int32, shape, 0) + row_off).astype(jnp.uint32)
    c = jax.lax.broadcasted_iota(jnp.int32, shape, 1).astype(jnp.uint32)
    x = (seed.astype(jnp.uint32)
         + r * jnp.uint32(0x9E3779B1)
         + c * jnp.uint32(0x85EBCA77)
         + jnp.uint32((salt * 0xC2B2AE3D) & 0xFFFFFFFF))
    x = x ^ (x >> jnp.uint32(15))
    x = x * jnp.uint32(0x2C1B3C6D)
    x = x ^ (x >> jnp.uint32(12))
    x = x * jnp.uint32(0x297A2D39)
    x = x ^ (x >> jnp.uint32(15))
    return (x >> jnp.uint32(8)).astype(jnp.float32) * jnp.float32(1.0 / (1 << 24))


def _dropout_half(x, u, train):
    # inverted dropout, p = 0.5; disabled when train == 0
    kept = jnp.where(u >= 0.5, x * 2.0, 0.0)
    return jnp.where(train != 0, kept, x)


def _tinykg(x, u):
    # per-node (row) min/max rescale into [0, B] + stochastic rounding to ints
    mx = jnp.max(x, axis=1, keepdims=True)
    mn = jnp.min(x, axis=1, keepdims=True)
    off = mx - mn
    safe = jnp.where(off > 0.0, off, 1.0)
    s = (B_QUANT * (x - mn)) / safe
    fl = jnp.floor(s)
    r = fl + jnp.where(s - fl > u, 1.0, 0.0)     # sto_op(x) = floor(x) + (frac > rand)
    return jnp.where(off > 0.0, r, 0.0)          # guard degenerate rows (max == min)


# --------------------------------- kernels -----------------------------------

def _proj_kernel(x_ref, wl_ref, wr_ref, zl_ref, zr_ref):
    # z_l = x @ W_l (bf16 out, neighbour path), z_r = x @ W_r (f32, root path)
    x = x_ref[...]
    zl_ref[...] = jnp.dot(x, wl_ref[...],
                          preferred_element_type=jnp.float32).astype(jnp.bfloat16)
    zr_ref[...] = jnp.dot(x, wr_ref[...], preferred_element_type=jnp.float32)


def _layer1_tail_kernel(scal_ref, a_ref, dinv_ref, zl_ref, zr_ref, b1_ref, q1_ref):
    # SAGEConv1 tail: (mask_tile @ (xW_l)) * 1/deg + xW_r + b -> ReLU -> Dropout -> tinykg
    tm = q1_ref.shape[0]
    row_off = pl.program_id(0) * tm
    seed = scal_ref[0]
    train = scal_ref[2]

    a_bf = a_ref[...].astype(jnp.bfloat16)       # int8 edge counts -> bf16 (exact)
    agg = jnp.dot(a_bf, zl_ref[...],
                  preferred_element_type=jnp.float32) * dinv_ref[...]
    h = agg + zr_ref[...] + b1_ref[...]
    h = jnp.maximum(h, 0.0)
    h = _dropout_half(h, _uniform01(seed, row_off, h.shape, 1), train)
    q1 = _tinykg(h, _uniform01(seed, row_off, h.shape, 2))
    q1_ref[...] = q1.astype(jnp.bfloat16)        # integers <= 64 => exact in bf16


def _layer2_postmp_kernel(scal_ref, a_ref, dinv_ref, q1_ref,
                          wl2_ref, wr2_ref, b2_ref,
                          w1_ref, c1_ref, w2_ref, c2_ref,
                          q2_ref, out_ref):
    # Fused: SAGEConv(32,32) -> ReLU -> Dropout -> tinykg -> post_mp -> log_softmax
    tm = q2_ref.shape[0]
    row_off = pl.program_id(0) * tm
    seed = scal_ref[1]
    train = scal_ref[2]

    a_bf = a_ref[...].astype(jnp.bfloat16)
    agg = jnp.dot(a_bf, q1_ref[...],
                  preferred_element_type=jnp.float32) * dinv_ref[...]
    root = q1_ref[pl.ds(row_off, tm), :].astype(jnp.float32)
    h = (jnp.dot(agg, wl2_ref[...], preferred_element_type=jnp.float32)
         + jnp.dot(root, wr2_ref[...], preferred_element_type=jnp.float32)
         + b2_ref[...])
    h = jnp.maximum(h, 0.0)
    h = _dropout_half(h, _uniform01(seed, row_off, h.shape, 3), train)
    q2 = _tinykg(h, _uniform01(seed, row_off, h.shape, 4))
    q2_ref[...] = q2

    # post_mp: Linear(32,32) -> Dropout(0.5) -> Linear(32, 7 padded to 128)
    g = jnp.dot(q2, w1_ref[...], preferred_element_type=jnp.float32) + c1_ref[...]
    g = _dropout_half(g, _uniform01(seed, row_off, g.shape, 5), train)
    y = jnp.dot(g, w2_ref[...], preferred_element_type=jnp.float32) + c2_ref[...]

    # log_softmax over the lane-dense class dim; padded columns sit at -1e30
    m = jnp.max(y, axis=1, keepdims=True)
    z = y - m
    lse = jnp.log(jnp.sum(jnp.exp(z), axis=1, keepdims=True))
    out_ref[...] = z - lse


# ------------------------------ pallas wrappers -------------------------------

def _project(x_bf, wl, wr, tm):
    n_pad, f_pad = x_bf.shape
    grid = (n_pad // tm,)
    flops = 2 * n_pad * f_pad * 64
    bytes_acc = x_bf.size * 2 + (wl.size + wr.size) * 2 + n_pad * 32 * (2 + 4)
    return pl.pallas_call(
        _proj_kernel,
        out_shape=(jax.ShapeDtypeStruct((n_pad, 32), jnp.bfloat16),
                   jax.ShapeDtypeStruct((n_pad, 32), jnp.float32)),
        grid_spec=pltpu.PrefetchScalarGridSpec(
            num_scalar_prefetch=0,
            grid=grid,
            in_specs=[pl.BlockSpec((tm, f_pad), lambda i: (i, 0)),
                      pl.BlockSpec((f_pad, 32), lambda i: (0, 0)),
                      pl.BlockSpec((f_pad, 32), lambda i: (0, 0))],
            out_specs=(pl.BlockSpec((tm, 32), lambda i: (i, 0)),
                       pl.BlockSpec((tm, 32), lambda i: (i, 0)))),
        compiler_params=pltpu.CompilerParams(
            dimension_semantics=("parallel",),
            vmem_limit_bytes=_vmem_limit(tm * f_pad * 2, f_pad * 64 * 2,
                                         tm * 32 * 2, tm * 32 * 4)),
        cost_estimate=pl.CostEstimate(flops=flops, transcendentals=0,
                                      bytes_accessed=bytes_acc),
    )(x_bf, wl, wr)


def _layer1_tail(scal, a_mask, dinv, z_l, z_r, b1, tm):
    n_pad = a_mask.shape[0]
    return pl.pallas_call(
        _layer1_tail_kernel,
        out_shape=jax.ShapeDtypeStruct((n_pad, 32), jnp.bfloat16),
        grid_spec=pltpu.PrefetchScalarGridSpec(
            num_scalar_prefetch=1,
            grid=(n_pad // tm,),
            in_specs=[pl.BlockSpec((tm, n_pad), lambda i, s: (i, 0)),   # int8 mask rows
                      pl.BlockSpec((tm, 1), lambda i, s: (i, 0)),       # 1/deg rows (f32)
                      pl.BlockSpec((n_pad, 32), lambda i, s: (0, 0)),   # x@W_l (resident)
                      pl.BlockSpec((tm, 32), lambda i, s: (i, 0)),      # x@W_r rows
                      pl.BlockSpec((1, 32), lambda i, s: (0, 0))],      # bias
            out_specs=pl.BlockSpec((tm, 32), lambda i, s: (i, 0))),
        compiler_params=pltpu.CompilerParams(
            dimension_semantics=("parallel",),
            vmem_limit_bytes=_vmem_limit(tm * n_pad, tm * n_pad * 2,
                                         n_pad * 32 * 2, tm * 32 * 4)),
    )(scal, a_mask, dinv, z_l, z_r, b1)


def _layer2_postmp(scal, a_mask, dinv, q1, wl2, wr2, b2,
                   w_mp1, b_mp1, w_mp2_pad, b_mp2_pad, tm):
    n_pad = a_mask.shape[0]
    small = lambda r, c: pl.BlockSpec((r, c), lambda i, s: (0, 0))
    return pl.pallas_call(
        _layer2_postmp_kernel,
        out_shape=(jax.ShapeDtypeStruct((n_pad, 32), jnp.float32),
                   jax.ShapeDtypeStruct((n_pad, C_PAD), jnp.float32)),
        grid_spec=pltpu.PrefetchScalarGridSpec(
            num_scalar_prefetch=1,
            grid=(n_pad // tm,),
            in_specs=[pl.BlockSpec((tm, n_pad), lambda i, s: (i, 0)),   # int8 mask rows
                      pl.BlockSpec((tm, 1), lambda i, s: (i, 0)),       # 1/deg rows
                      pl.BlockSpec((n_pad, 32), lambda i, s: (0, 0)),   # q1 (resident, bf16)
                      small(32, 32), small(32, 32), small(1, 32),       # W_l2, W_r2, b2
                      small(32, 32), small(1, 32),                      # W_mp1, b_mp1
                      small(32, C_PAD), small(1, C_PAD)],               # W_mp2, b_mp2 (padded)
            out_specs=(pl.BlockSpec((tm, 32), lambda i, s: (i, 0)),
                       pl.BlockSpec((tm, C_PAD), lambda i, s: (i, 0)))),
        compiler_params=pltpu.CompilerParams(
            dimension_semantics=("parallel",),
            vmem_limit_bytes=_vmem_limit(tm * n_pad, tm * n_pad * 2,
                                         n_pad * 32 * 2, tm * C_PAD * 4)),
    )(scal, a_mask, dinv, q1, wl2, wr2, b2, w_mp1, b_mp1, w_mp2_pad, b_mp2_pad)


# --------------------------------- forward ------------------------------------

def graphsage_forward(x, edge_index, params, key, training=True):
    """Full GraphSAGE.forward. Returns (log_probs, int_conv1, int_conv2)."""
    N, F_in = x.shape

    # row tile: 512 at Cora scale, smaller (32-aligned for int8 layout) for tiny graphs
    if N >= 2048:
        tm = 512
    elif N >= 512:
        tm = 256
    else:
        tm = _round_up(max(N, 32), 32)
    n_pad = _round_up(N, tm)
    f_pad = _round_up(F_in, 128)

    # glue (XLA): int8 edge-multiplicity mask + per-row 1/deg (exact mean aggregation)
    src, dst = edge_index[0], edge_index[1]
    counts = jnp.zeros((N, N), jnp.float32).at[dst, src].add(1.0)
    deg = counts.sum(axis=1, keepdims=True)
    deg_inv = jnp.where(deg > 0.0, 1.0 / deg, 0.0)
    a_mask = jnp.pad(counts, ((0, n_pad - N), (0, n_pad - N))).astype(jnp.int8)
    dinv = jnp.pad(deg_inv, ((0, n_pad - N), (0, 0)))

    x_bf = jnp.pad(x, ((0, n_pad - N), (0, f_pad - F_in))).astype(jnp.bfloat16)
    wl1 = jnp.pad(params["wl1"], ((0, f_pad - F_in), (0, 0))).astype(jnp.bfloat16)
    wr1 = jnp.pad(params["wr1"], ((0, f_pad - F_in), (0, 0))).astype(jnp.bfloat16)

    # scalars: [seed_layer1, seed_layer2, training_flag, pad]
    seeds = jax.random.randint(key, (2,), 0, 2 ** 30, dtype=jnp.int32)
    scal = jnp.concatenate([seeds, jnp.array([1 if training else 0, 0], jnp.int32)])

    # kernel 1: z_l = x@W_l (bf16), z_r = x@W_r (f32)  — single K step, dual outputs
    z_l, z_r = _project(x_bf, wl1, wr1, tm)

    # kernel 2: mean-aggregate + root + ReLU + dropout + tinykg -> q1 (bf16, exact ints)
    q1 = _layer1_tail(scal, a_mask, dinv, z_l, z_r, params["b1"], tm)

    # lane-dense padding for the final 7-class head
    w_mp2_pad = jnp.pad(params["w_mp2"], ((0, 0), (0, C_PAD - 7)))
    b_mp2_pad = jnp.pad(params["b_mp2"], ((0, 0), (0, C_PAD - 7)),
                        constant_values=NEG_BIG)

    # kernel 3: SAGEConv2 + ReLU + dropout + tinykg + post_mp + log_softmax (fused)
    q2, logp = _layer2_postmp(scal, a_mask, dinv, q1,
                              params["wl2"], params["wr2"], params["b2"],
                              params["w_mp1"], params["b_mp1"],
                              w_mp2_pad, b_mp2_pad, tm)

    return logp[:N, :7], q1[:N].astype(jnp.float32), q2[:N]


def init_params(key):
    ks = jax.random.split(key, 8)
    s = 0.05
    return {
        # SAGEConv(1433, 32): lin_l (neighbours, with bias), lin_r (root, no bias)
        "wl1": jax.random.normal(ks[0], (1433, 32), jnp.float32) * s,
        "wr1": jax.random.normal(ks[1], (1433, 32), jnp.float32) * s,
        "b1": jnp.zeros((1, 32), jnp.float32),
        # SAGEConv(32, 32)
        "wl2": jax.random.normal(ks[2], (32, 32), jnp.float32) * s,
        "wr2": jax.random.normal(ks[3], (32, 32), jnp.float32) * s,
        "b2": jnp.zeros((1, 32), jnp.float32),
        # post_mp: Linear(32,32), Linear(32,7)
        "w_mp1": jax.random.normal(ks[4], (32, 32), jnp.float32) * s,
        "b_mp1": jnp.zeros((1, 32), jnp.float32),
        "w_mp2": jax.random.normal(ks[5], (32, 7), jnp.float32) * s,
        "b_mp2": jnp.zeros((1, 7), jnp.float32),
    }


if __name__ == "__main__":
    key = jax.random.PRNGKey(0)
    k_x, k_e, k_p, k_seed = jax.random.split(key, 4)

    N, F_IN, E = 64, 1433, 256  # small synthetic graph (module fixes F_in=1433)
    x = jax.random.normal(k_x, (N, F_IN), jnp.float32)
    edge_index = jax.random.randint(k_e, (2, E), 0, N, jnp.int32)
    params = init_params(k_p)

    log_probs, int_conv1, int_conv2 = graphsage_forward(x, edge_index, params, k_seed)
    jax.block_until_ready((log_probs, int_conv1, int_conv2))

    assert log_probs.shape == (N, 7)
    assert int_conv1.shape == (N, 32) and int_conv2.shape == (N, 32)
    assert bool(jnp.all(jnp.isfinite(log_probs)))
    print("KERNEL_OK")
</pallas_src>

<mosaic_0001>
module attributes {stable_mosaic.version = 11 : i64} {
  func.func @_proj_kernel(%arg0: i32, %arg1: memref<64x1536xbf16, #tpu.memory_space<vmem>>, %arg2: memref<1536x32xbf16, #tpu.memory_space<vmem>>, %arg3: memref<1536x32xbf16, #tpu.memory_space<vmem>>, %arg4: memref<64x32xbf16, #tpu.memory_space<vmem>>, %arg5: memref<64x32xf32, #tpu.memory_space<vmem>>) attributes {dimension_semantics = [#tpu.dimension_semantics<parallel>], iteration_bounds = array<i64: 1>, scalar_prefetch = 0 : i64, scratch_operands = 0 : i64, tpu.core_type = #tpu.core_type<tc>, window_params = [{transform_indices = @transform_0, window_bounds = array<i64: 64, 1536>}, {pipeline_mode = #tpu.pipeline_mode<synchronous>, transform_indices = @transform_1, window_bounds = array<i64: 1536, 32>}, {pipeline_mode = #tpu.pipeline_mode<synchronous>, transform_indices = @transform_2, window_bounds = array<i64: 1536, 32>}, {transform_indices = @transform_3, window_bounds = array<i64: 64, 32>}, {transform_indices = @transform_4, window_bounds = array<i64: 64, 32>}]} {
    %c0 = arith.constant 0 : index
    %c0_0 = arith.constant 0 : index
    %0 = vector.load %arg1[%c0, %c0_0] : memref<64x1536xbf16, #tpu.memory_space<vmem>>, vector<64x1536xbf16>
    %c0_1 = arith.constant 0 : index
    %c0_2 = arith.constant 0 : index
    %1 = vector.load %arg2[%c0_1, %c0_2] : memref<1536x32xbf16, #tpu.memory_space<vmem>>, vector<1536x32xbf16>
    %cst = arith.constant dense<0.000000e+00> : vector<64x32xf32>
    %2 = tpu.matmul %0, %1, %cst {dimension_numbers = #tpu.dot_dimension_numbers<[1], [0], [0], [1], [0, 0, 1, 1], [], []>} : vector<64x1536xbf16>, vector<1536x32xbf16>, vector<64x32xf32> -> vector<64x32xf32>
    %3 = arith.truncf %2 : vector<64x32xf32> to vector<64x32xbf16>
    %c0_3 = arith.constant 0 : index
    %c0_4 = arith.constant 0 : index
    %4 = vector.load %arg4[%c0_3, %c0_4] : memref<64x32xbf16, #tpu.memory_space<vmem>>, vector<64x32xbf16>
    tpu.vector_store %arg4[%c0_3, %c0_4], %3 {strides = array<i32>} : memref<64x32xbf16, #tpu.memory_space<vmem>>, vector<64x32xbf16>,
    %c0_5 = arith.constant 0 : index
    %c0_6 = arith.constant 0 : index
    %5 = vector.load %arg3[%c0_5, %c0_6] : memref<1536x32xbf16, #tpu.memory_space<vmem>>, vector<1536x32xbf16>
    %cst_7 = arith.constant dense<0.000000e+00> : vector<64x32xf32>
    %6 = tpu.matmul %0, %5, %cst_7 {dimension_numbers = #tpu.dot_dimension_numbers<[1], [0], [0], [1], [0, 0, 1, 1], [], []>} : vector<64x1536xbf16>, vector<1536x32xbf16>, vector<64x32xf32> -> vector<64x32xf32>
    %c0_8 = arith.constant 0 : index
    %c0_9 = arith.constant 0 : index
    %7 = vector.load %arg5[%c0_8, %c0_9] : memref<64x32xf32, #tpu.memory_space<vmem>>, vector<64x32xf32>
    tpu.vector_store %arg5[%c0_8, %c0_9], %6 {strides = array<i32>} : memref<64x32xf32, #tpu.memory_space<vmem>>, vector<64x32xf32>,
    return
  }
  func.func @transform_0(%arg0: i32) -> (i32, i32) {
    %c0_i32 = arith.constant 0 : i32
    %c0_i32_0 = arith.constant 0 : i32
    return %arg0, %c0_i32 : i32, i32
  }
  func.func @transform_1(%arg0: i32) -> (i32, i32) {
    %c0_i32 = arith.constant 0 : i32
    %c0_i32_0 = arith.constant 0 : i32
    %c0_i32_1 = arith.constant 0 : i32
    return %c0_i32, %c0_i32_0 : i32, i32
  }
  func.func @transform_2(%arg0: i32) -> (i32, i32) {
    %c0_i32 = arith.constant 0 : i32
    %c0_i32_0 = arith.constant 0 : i32
    %c0_i32_1 = arith.constant 0 : i32
    return %c0_i32, %c0_i32_0 : i32, i32
  }
  func.func @transform_3(%arg0: i32) -> (i32, i32) {
    %c0_i32 = arith.constant 0 : i32
    %c0_i32_0 = arith.constant 0 : i32
    return %arg0, %c0_i32 : i32, i32
  }
  func.func @transform_4(%arg0: i32) -> (i32, i32) {
    %c0_i32 = arith.constant 0 : i32
    %c0_i32_0 = arith.constant 0 : i32
    return %arg0, %c0_i32 : i32, i32
  }
}

</mosaic_0001>

<llo_original>
// kernel: tpu_custom_call.1
$region0: #{tpu_custom_call.1}
  #allocation0 [shape = 'u32[]', space=smem, size = 0x4, offset = 0x4, fixed_abs, tag = 'smem constant byte address 0x4 - core index']
  #allocation1 [shape = 'u32[144,128]{1,0:T(1,128)}', space=vmem, size = 0x12000, scoped, tag = 'internal scratch']
  %s0 = inlined_call_operand.vmem [shape: bf16[64,1536], index: 0, kind: input, shape index: {}]
  %s1 = inlined_call_operand.vmem [shape: bf16[1536,32], index: 1, kind: input, shape index: {}]
  %s2 = inlined_call_operand.vmem [shape: bf16[1536,32], index: 2, kind: input, shape index: {}]
  %s3 = inlined_call_operand.vmem [shape: bf16[64,32], index: 3, kind: output, shape index: {0}]
  %s4 = inlined_call_operand.vmem [shape: f32[64,32], index: 4, kind: output, shape index: {1}]
  %5 = xla_tuple %s3, %s4
  %s6 = sld [smem:[#allocation0]]
  $region30: #{tpu_custom_call.1} parent=0
    _
  %s8 = ssub.s32 1, %s6
  %s9 = scalar_select 0, %s8, %s6
  // Predicated region
  $region2: #{tpu_custom_call.1} parent=0 // pred_check
    _
  $region3: #{tpu_custom_call.1} parent=0 // pred_check_branch
    %11 = sbr.rel (0) target = $region5
  $region4: #{tpu_custom_call.1} parent=0 // pred_region
    _
  $region5: #{tpu_custom_call.1} parent=0 // pred_fallthru
    _
  // Predicated region
  $region6: #{tpu_custom_call.1} parent=0 // pred_check
    _
  $region7: #{tpu_custom_call.1} parent=0 // pred_check_branch
    %13 = sbr.rel (0) target = $region9
  $region8: #{tpu_custom_call.1} parent=0 // pred_region
    _
  $region9: #{tpu_custom_call.1} parent=0 // pred_fallthru
    _
  // Predicated region
  $region10: #{tpu_custom_call.1} parent=0 // pred_check
    _
  $region11: #{tpu_custom_call.1} parent=0 // pred_check_branch
    %15 = sbr.rel (0) target = $region13
  $region12: #{tpu_custom_call.1} parent=0 // pred_region
    _
  $region13: #{tpu_custom_call.1} parent=0 // pred_fallthru
    _
  %v17 = vld [vmem:[%s0] sm:$0xff]
  %v18 = vld [vmem:[%s0 + $0x8] sm:$0xff]
  %v19 = vld [vmem:[%s0 + $0x10] sm:$0xff]
  %v20 = vld [vmem:[%s0 + $0x18] sm:$0xff]
  %v21 = vld [vmem:[%s0 + $0x20] sm:$0xff]
  %v22 = vld [vmem:[%s0 + $0x28] sm:$0xff]
  %v23 = vld [vmem:[%s0 + $0x30] sm:$0xff]
  %v24 = vld [vmem:[%s0 + $0x38] sm:$0xff]
  %v25 = vld [vmem:[%s0 + $0x40] sm:$0xff]
  %v26 = vld [vmem:[%s0 + $0x48] sm:$0xff]
  %v27 = vld [vmem:[%s0 + $0x50] sm:$0xff]
  %v28 = vld [vmem:[%s0 + $0x58] sm:$0xff]
  %v29 = vld [vmem:[%s0 + $0x60] sm:$0xff]
  %v30 = vld [vmem:[%s0 + $0x68] sm:$0xff]
  %v31 = vld [vmem:[%s0 + $0x70] sm:$0xff]
  %v32 = vld [vmem:[%s0 + $0x78] sm:$0xff]
  %v33 = vld [vmem:[%s0 + $0x80] sm:$0xff]
  %v34 = vld [vmem:[%s0 + $0x88] sm:$0xff]
  %v35 = vld [vmem:[%s0 + $0x90] sm:$0xff]
  %v36 = vld [vmem:[%s0 + $0x98] sm:$0xff]
  %v37 = vld [vmem:[%s0 + $0xa0] sm:$0xff]
  %v38 = vld [vmem:[%s0 + $0xa8] sm:$0xff]
  %v39 = vld [vmem:[%s0 + $0xb0] sm:$0xff]
  %v40 = vld [vmem:[%s0 + $0xb8] sm:$0xff]
  %v41 = vld [vmem:[%s0 + $0xc0] sm:$0xff]
  %v42 = vld [vmem:[%s0 + $0xc8] sm:$0xff]
  %v43 = vld [vmem:[%s0 + $0xd0] sm:$0xff]
  %v44 = vld [vmem:[%s0 + $0xd8] sm:$0xff]
  %v45 = vld [vmem:[%s0 + $0xe0] sm:$0xff]
  %v46 = vld [vmem:[%s0 + $0xe8] sm:$0xff]
  %v47 = vld [vmem:[%s0 + $0xf0] sm:$0xff]
  %v48 = vld [vmem:[%s0 + $0xf8] sm:$0xff]
  %v49 = vld [vmem:[%s0 + $0x100] sm:$0xff]
  %v50 = vld [vmem:[%s0 + $0x108] sm:$0xff]
  %v51 = vld [vmem:[%s0 + $0x110] sm:$0xff]
  %v52 = vld [vmem:[%s0 + $0x118] sm:$0xff]
  %v53 = vld [vmem:[%s0 + $0x120] sm:$0xff]
  %v54 = vld [vmem:[%s0 + $0x128] sm:$0xff]
  %v55 = vld [vmem:[%s0 + $0x130] sm:$0xff]
  %v56 = vld [vmem:[%s0 + $0x138] sm:$0xff]
  %v57 = vld [vmem:[%s0 + $0x140] sm:$0xff]
  %v58 = vld [vmem:[%s0 + $0x148] sm:$0xff]
  %v59 = vld [vmem:[%s0 + $0x150] sm:$0xff]
  %v60 = vld [vmem:[%s0 + $0x158] sm:$0xff]
  %v61 = vld [vmem:[%s0 + $0x160] sm:$0xff]
  %v62 = vld [vmem:[%s0 + $0x168] sm:$0xff]
  %v63 = vld [vmem:[%s0 + $0x170] sm:$0xff]
  %v64 = vld [vmem:[%s0 + $0x178] sm:$0xff]
  %v65 = vld [vmem:[%s1] sm:$0xf]
  %v66 = vld [vmem:[%s1 + $0x4] sm:$0xf]
  %v67 = vld [vmem:[%s1 + $0x8] sm:$0xf]
  %v68 = vld [vmem:[%s1 + $0xc] sm:$0xf]
  %v69 = vld [vmem:[%s1 + $0x10] sm:$0xf]
  %v70 = vld [vmem:[%s1 + $0x14] sm:$0xf]
  %v71 = vld [vmem:[%s1 + $0x18] sm:$0xf]
  %v72 = vld [vmem:[%s1 + $0x1c] sm:$0xf]
  %v73 = vld [vmem:[%s1 + $0x20] sm:$0xf]
  %v74 = vld [vmem:[%s1 + $0x24] sm:$0xf]
  %v75 = vld [vmem:[%s1 + $0x28] sm:$0xf]
  %v76 = vld [vmem:[%s1 + $0x2c] sm:$0xf]
  %v77 = vld [vmem:[%s1 + $0x30] sm:$0xf]
  %v78 = vld [vmem:[%s1 + $0x34] sm:$0xf]
  %v79 = vld [vmem:[%s1 + $0x38] sm:$0xf]
  %v80 = vld [vmem:[%s1 + $0x3c] sm:$0xf]
  %v81 = vld [vmem:[%s1 + $0x40] sm:$0xf]
  %v82 = vld [vmem:[%s1 + $0x44] sm:$0xf]
  %v83 = vld [vmem:[%s1 + $0x48] sm:$0xf]
  %v84 = vld [vmem:[%s1 + $0x4c] sm:$0xf]
  %v85 = vld [vmem:[%s1 + $0x50] sm:$0xf]
  %v86 = vld [vmem:[%s1 + $0x54] sm:$0xf]
  %v87 = vld [vmem:[%s1 + $0x58] sm:$0xf]
  %v88 = vld [vmem:[%s1 + $0x5c] sm:$0xf]
  %v89 = vld [vmem:[%s1 + $0x60] sm:$0xf]
  %v90 = vld [vmem:[%s1 + $0x64] sm:$0xf]
  %v91 = vld [vmem:[%s1 + $0x68] sm:$0xf]
  %v92 = vld [vmem:[%s1 + $0x6c] sm:$0xf]
  %v93 = vld [vmem:[%s1 + $0x70] sm:$0xf]
  %v94 = vld [vmem:[%s1 + $0x74] sm:$0xf]
  %v95 = vld [vmem:[%s1 + $0x78] sm:$0xf]
  %v96 = vld [vmem:[%s1 + $0x7c] sm:$0xf]
  %v97 = vld [vmem:[%s1 + $0x80] sm:$0xf]
  %v98 = vld [vmem:[%s1 + $0x84] sm:$0xf]
  %v99 = vld [vmem:[%s1 + $0x88] sm:$0xf]
  %v100 = vld [vmem:[%s1 + $0x8c] sm:$0xf]
  %v101 = vld [vmem:[%s1 + $0x90] sm:$0xf]
  %v102 = vld [vmem:[%s1 + $0x94] sm:$0xf]
  %v103 = vld [vmem:[%s1 + $0x98] sm:$0xf]
  %v104 = vld [vmem:[%s1 + $0x9c] sm:$0xf]
  %v105 = vld [vmem:[%s1 + $0xa0] sm:$0xf]
  %v106 = vld [vmem:[%s1 + $0xa4] sm:$0xf]
  %v107 = vld [vmem:[%s1 + $0xa8] sm:$0xf]
  %v108 = vld [vmem:[%s1 + $0xac] sm:$0xf]
  %v109 = vld [vmem:[%s1 + $0xb0] sm:$0xf]
  %v110 = vld [vmem:[%s1 + $0xb4] sm:$0xf]
  %v111 = vld [vmem:[%s1 + $0xb8] sm:$0xf]
  %v112 = vld [vmem:[%s1 + $0xbc] sm:$0xf]
  %v113 = vld [vmem:[%s1 + $0xc0] sm:$0xf]
  %v114 = vld [vmem:[%s1 + $0xc4] sm:$0xf]
  %v115 = vld [vmem:[%s1 + $0xc8] sm:$0xf]
  %v116 = vld [vmem:[%s1 + $0xcc] sm:$0xf]
  %v117 = vld [vmem:[%s1 + $0xd0] sm:$0xf]
  %v118 = vld [vmem:[%s1 + $0xd4] sm:$0xf]
  %v119 = vld [vmem:[%s1 + $0xd8] sm:$0xf]
  %v120 = vld [vmem:[%s1 + $0xdc] sm:$0xf]
  %v121 = vld [vmem:[%s1 + $0xe0] sm:$0xf]
  %v122 = vld [vmem:[%s1 + $0xe4] sm:$0xf]
  %v123 = vld [vmem:[%s1 + $0xe8] sm:$0xf]
  %v124 = vld [vmem:[%s1 + $0xec] sm:$0xf]
  %v125 = vld [vmem:[%s1 + $0xf0] sm:$0xf]
  %v126 = vld [vmem:[%s1 + $0xf4] sm:$0xf]
  %v127 = vld [vmem:[%s1 + $0xf8] sm:$0xf]
  %v128 = vld [vmem:[%s1 + $0xfc] sm:$0xf]
  %v129 = vld [vmem:[%s1 + $0x100] sm:$0xf]
  %v130 = vld [vmem:[%s1 + $0x104] sm:$0xf]
  %v131 = vld [vmem:[%s1 + $0x108] sm:$0xf]
  %v132 = vld [vmem:[%s1 + $0x10c] sm:$0xf]
  %v133 = vld [vmem:[%s1 + $0x110] sm:$0xf]
  %v134 = vld [vmem:[%s1 + $0x114] sm:$0xf]
  %v135 = vld [vmem:[%s1 + $0x118] sm:$0xf]
  %v136 = vld [vmem:[%s1 + $0x11c] sm:$0xf]
  %v137 = vld [vmem:[%s1 + $0x120] sm:$0xf]
  %v138 = vld [vmem:[%s1 + $0x124] sm:$0xf]
  %v139 = vld [vmem:[%s1 + $0x128] sm:$0xf]
  %v140 = vld [vmem:[%s1 + $0x12c] sm:$0xf]
  %v141 = vld [vmem:[%s1 + $0x130] sm:$0xf]
  %v142 = vld [vmem:[%s1 + $0x134] sm:$0xf]
  %v143 = vld [vmem:[%s1 + $0x138] sm:$0xf]
  %v144 = vld [vmem:[%s1 + $0x13c] sm:$0xf]
  %v145 = vld [vmem:[%s1 + $0x140] sm:$0xf]
  %v146 = vld [vmem:[%s1 + $0x144] sm:$0xf]
  %v147 = vld [vmem:[%s1 + $0x148] sm:$0xf]
  %v148 = vld [vmem:[%s1 + $0x14c] sm:$0xf]
  %v149 = vld [vmem:[%s1 + $0x150] sm:$0xf]
  %v150 = vld [vmem:[%s1 + $0x154] sm:$0xf]
  %v151 = vld [vmem:[%s1 + $0x158] sm:$0xf]
  %v152 = vld [vmem:[%s1 + $0x15c] sm:$0xf]
  %v153 = vld [vmem:[%s1 + $0x160] sm:$0xf]
  %v154 = vld [vmem:[%s1 + $0x164] sm:$0xf]
  %v155 = vld [vmem:[%s1 + $0x168] sm:$0xf]
  %v156 = vld [vmem:[%s1 + $0x16c] sm:$0xf]
  %v157 = vld [vmem:[%s1 + $0x170] sm:$0xf]
  %v158 = vld [vmem:[%s1 + $0x174] sm:$0xf]
  %v159 = vld [vmem:[%s1 + $0x178] sm:$0xf]
  %v160 = vld [vmem:[%s1 + $0x17c] sm:$0xf]
  %v161 = vld [vmem:[%s1 + $0x180] sm:$0xf]
  %v162 = vld [vmem:[%s1 + $0x184] sm:$0xf]
  %v163 = vld [vmem:[%s1 + $0x188] sm:$0xf]
  %v164 = vld [vmem:[%s1 + $0x18c] sm:$0xf]
  %v165 = vld [vmem:[%s1 + $0x190] sm:$0xf]
  %v166 = vld [vmem:[%s1 + $0x194] sm:$0xf]
  %v167 = vld [vmem:[%s1 + $0x198] sm:$0xf]
  %v168 = vld [vmem:[%s1 + $0x19c] sm:$0xf]
  %v169 = vld [vmem:[%s1 + $0x1a0] sm:$0xf]
  %v170 = vld [vmem:[%s1 + $0x1a4] sm:$0xf]
  %v171 = vld [vmem:[%s1 + $0x1a8] sm:$0xf]
  %v172 = vld [vmem:[%s1 + $0x1ac] sm:$0xf]
  %v173 = vld [vmem:[%s1 + $0x1b0] sm:$0xf]
  %v174 = vld [vmem:[%s1 + $0x1b4] sm:$0xf]
  %v175 = vld [vmem:[%s1 + $0x1b8] sm:$0xf]
  %v176 = vld [vmem:[%s1 + $0x1bc] sm:$0xf]
  %v177 = vld [vmem:[%s1 + $0x1c0] sm:$0xf]
  %v178 = vld [vmem:[%s1 + $0x1c4] sm:$0xf]
  %v179 = vld [vmem:[%s1 + $0x1c8] sm:$0xf]
  %v180 = vld [vmem:[%s1 + $0x1cc] sm:$0xf]
  %v181 = vld [vmem:[%s1 + $0x1d0] sm:$0xf]
  %v182 = vld [vmem:[%s1 + $0x1d4] sm:$0xf]
  %v183 = vld [vmem:[%s1 + $0x1d8] sm:$0xf]
  %v184 = vld [vmem:[%s1 + $0x1dc] sm:$0xf]
  %v185 = vld [vmem:[%s1 + $0x1e0] sm:$0xf]
  %v186 = vld [vmem:[%s1 + $0x1e4] sm:$0xf]
  %v187 = vld [vmem:[%s1 + $0x1e8] sm:$0xf]
  %v188 = vld [vmem:[%s1 + $0x1ec] sm:$0xf]
  %v189 = vld [vmem:[%s1 + $0x1f0] sm:$0xf]
  %v190 = vld [vmem:[%s1 + $0x1f4] sm:$0xf]
  %v191 = vld [vmem:[%s1 + $0x1f8] sm:$0xf]
  %v192 = vld [vmem:[%s1 + $0x1fc] sm:$0xf]
  %v193 = vld [vmem:[%s1 + $0x200] sm:$0xf]
  %v194 = vld [vmem:[%s1 + $0x204] sm:$0xf]
  %v195 = vld [vmem:[%s1 + $0x208] sm:$0xf]
  %v196 = vld [vmem:[%s1 + $0x20c] sm:$0xf]
  %v197 = vld [vmem:[%s1 + $0x210] sm:$0xf]
  %v198 = vld [vmem:[%s1 + $0x214] sm:$0xf]
  %v199 = vld [vmem:[%s1 + $0x218] sm:$0xf]
  %v200 = vld [vmem:[%s1 + $0x21c] sm:$0xf]
  %v201 = vld [vmem:[%s1 + $0x220] sm:$0xf]
  %v202 = vld [vmem:[%s1 + $0x224] sm:$0xf]
  %v203 = vld [vmem:[%s1 + $0x228] sm:$0xf]
  %v204 = vld [vmem:[%s1 + $0x22c] sm:$0xf]
  %v205 = vld [vmem:[%s1 + $0x230] sm:$0xf]
  %v206 = vld [vmem:[%s1 + $0x234] sm:$0xf]
  %v207 = vld [vmem:[%s1 + $0x238] sm:$0xf]
  %v208 = vld [vmem:[%s1 + $0x23c] sm:$0xf]
  %v209 = vld [vmem:[%s1 + $0x240] sm:$0xf]
  %v210 = vld [vmem:[%s1 + $0x244] sm:$0xf]
  %v211 = vld [vmem:[%s1 + $0x248] sm:$0xf]
  %v212 = vld [vmem:[%s1 + $0x24c] sm:$0xf]
  %v213 = vld [vmem:[%s1 + $0x250] sm:$0xf]
  %v214 = vld [vmem:[%s1 + $0x254] sm:$0xf]
  %v215 = vld [vmem:[%s1 + $0x258] sm:$0xf]
  %v216 = vld [vmem:[%s1 + $0x25c] sm:$0xf]
  %v217 = vld [vmem:[%s1 + $0x260] sm:$0xf]
  %v218 = vld [vmem:[%s1 + $0x264] sm:$0xf]
  %v219 = vld [vmem:[%s1 + $0x268] sm:$0xf]
  %v220 = vld [vmem:[%s1 + $0x26c] sm:$0xf]
  %v221 = vld [vmem:[%s1 + $0x270] sm:$0xf]
  %v222 = vld [vmem:[%s1 + $0x274] sm:$0xf]
  %v223 = vld [vmem:[%s1 + $0x278] sm:$0xf]
  %v224 = vld [vmem:[%s1 + $0x27c] sm:$0xf]
  %v225 = vld [vmem:[%s1 + $0x280] sm:$0xf]
  %v226 = vld [vmem:[%s1 + $0x284] sm:$0xf]
  %v227 = vld [vmem:[%s1 + $0x288] sm:$0xf]
  %v228 = vld [vmem:[%s1 + $0x28c] sm:$0xf]
  %v229 = vld [vmem:[%s1 + $0x290] sm:$0xf]
  %v230 = vld [vmem:[%s1 + $0x294] sm:$0xf]
  %v231 = vld [vmem:[%s1 + $0x298] sm:$0xf]
  %v232 = vld [vmem:[%s1 + $0x29c] sm:$0xf]
  %v233 = vld [vmem:[%s1 + $0x2a0] sm:$0xf]
  %v234 = vld [vmem:[%s1 + $0x2a4] sm:$0xf]
  %v235 = vld [vmem:[%s1 + $0x2a8] sm:$0xf]
  %v236 = vld [vmem:[%s1 + $0x2ac] sm:$0xf]
  %v237 = vld [vmem:[%s1 + $0x2b0] sm:$0xf]
  %v238 = vld [vmem:[%s1 + $0x2b4] sm:$0xf]
  %v239 = vld [vmem:[%s1 + $0x2b8] sm:$0xf]
  %v240 = vld [vmem:[%s1 + $0x2bc] sm:$0xf]
  %v241 = vld [vmem:[%s1 + $0x2c0] sm:$0xf]
  %v242 = vld [vmem:[%s1 + $0x2c4] sm:$0xf]
  %v243 = vld [vmem:[%s1 + $0x2c8] sm:$0xf]
  %v244 = vld [vmem:[%s1 + $0x2cc] sm:$0xf]
  %v245 = vld [vmem:[%s1 + $0x2d0] sm:$0xf]
  %v246 = vld [vmem:[%s1 + $0x2d4] sm:$0xf]
  %v247 = vld [vmem:[%s1 + $0x2d8] sm:$0xf]
  %v248 = vld [vmem:[%s1 + $0x2dc] sm:$0xf]
  %v249 = vld [vmem:[%s1 + $0x2e0] sm:$0xf]
  %v250 = vld [vmem:[%s1 + $0x2e4] sm:$0xf]
  %v251 = vld [vmem:[%s1 + $0x2e8] sm:$0xf]
  %v252 = vld [vmem:[%s1 + $0x2ec] sm:$0xf]
  %v253 = vld [vmem:[%s1 + $0x2f0] sm:$0xf]
  %v254 = vld [vmem:[%s1 + $0x2f4] sm:$0xf]
  %v255 = vld [vmem:[%s1 + $0x2f8] sm:$0xf]
  %v256 = vld [vmem:[%s1 + $0x2fc] sm:$0xf]
  %v305 = vunpack.c.l.b16 %v17
  %v306 = vunpack.c.h.b16 %v17
  %v307 = vunpack.c.l.b16 %v18
  %v308 = vunpack.c.h.b16 %v18
  %v309 = vunpack.c.l.b16 %v19
  %v310 = vunpack.c.h.b16 %v19
  %v311 = vunpack.c.l.b16 %v20
  %v312 = vunpack.c.h.b16 %v20
  %v313 = vunpack.c.l.b16 %v21
  %v314 = vunpack.c.h.b16 %v21
  %v315 = vunpack.c.l.b16 %v22
  %v316 = vunpack.c.h.b16 %v22
  %v317 = vunpack.c.l.b16 %v23
  %v318 = vunpack.c.h.b16 %v23
  %v319 = vunpack.c.l.b16 %v24
  %v320 = vunpack.c.h.b16 %v24
  %v321 = vunpack.c.l.b16 %v25
  %v322 = vunpack.c.h.b16 %v25
  %v323 = vunpack.c.l.b16 %v26
  %v324 = vunpack.c.h.b16 %v26
  %v325 = vunpack.c.l.b16 %v27
  %v326 = vunpack.c.h.b16 %v27
  %v327 = vunpack.c.l.b16 %v28
  %v328 = vunpack.c.h.b16 %v28
  %v329 = vunpack.c.l.b16 %v29
  %v330 = vunpack.c.h.b16 %v29
  %v331 = vunpack.c.l.b16 %v30
  %v332 = vunpack.c.h.b16 %v30
  %v333 = vunpack.c.l.b16 %v31
  %v334 = vunpack.c.h.b16 %v31
  %v335 = vunpack.c.l.b16 %v32
  %v336 = vunpack.c.h.b16 %v32
  %v337 = vunpack.c.l.b16 %v33
  %v338 = vunpack.c.h.b16 %v33
  %v339 = vunpack.c.l.b16 %v34
  %v340 = vunpack.c.h.b16 %v34
  %v341 = vunpack.c.l.b16 %v35
  %v342 = vunpack.c.h.b16 %v35
  %v343 = vunpack.c.l.b16 %v36
  %v344 = vunpack.c.h.b16 %v36
  %v345 = vunpack.c.l.b16 %v37
  %v346 = vunpack.c.h.b16 %v37
  %v347 = vunpack.c.l.b16 %v38
  %v348 = vunpack.c.h.b16 %v38
  %v349 = vunpack.c.l.b16 %v39
  %v350 = vunpack.c.h.b16 %v39
  %v351 = vunpack.c.l.b16 %v40
  %v352 = vunpack.c.h.b16 %v40
  %v353 = vunpack.c.l.b16 %v41
  %v354 = vunpack.c.h.b16 %v41
  %v355 = vunpack.c.l.b16 %v42
  %v356 = vunpack.c.h.b16 %v42
  %v357 = vunpack.c.l.b16 %v43
  %v358 = vunpack.c.h.b16 %v43
  %v359 = vunpack.c.l.b16 %v44
  %v360 = vunpack.c.h.b16 %v44
  %v361 = vunpack.c.l.b16 %v45
  %v362 = vunpack.c.h.b16 %v45
  %v363 = vunpack.c.l.b16 %v46
  %v364 = vunpack.c.h.b16 %v46
  %v365 = vunpack.c.l.b16 %v47
  %v366 = vunpack.c.h.b16 %v47
  %v367 = vunpack.c.l.b16 %v48
  %v368 = vunpack.c.h.b16 %v48
  %v369 = vunpack.c.l.b16 %v49
  %v370 = vunpack.c.h.b16 %v49
  %v371 = vunpack.c.l.b16 %v50
  %v372 = vunpack.c.h.b16 %v50
  %v373 = vunpack.c.l.b16 %v51
  %v374 = vunpack.c.h.b16 %v51
  %v375 = vunpack.c.l.b16 %v52
  %v376 = vunpack.c.h.b16 %v52
  %v377 = vunpack.c.l.b16 %v53
  %v378 = vunpack.c.h.b16 %v53
  %v379 = vunpack.c.l.b16 %v54
  %v380 = vunpack.c.h.b16 %v54
  %v381 = vunpack.c.l.b16 %v55
  %v382 = vunpack.c.h.b16 %v55
  %v383 = vunpack.c.l.b16 %v56
  %v384 = vunpack.c.h.b16 %v56
  %v385 = vunpack.c.l.b16 %v57
  %v386 = vunpack.c.h.b16 %v57
  %v387 = vunpack.c.l.b16 %v58
  %v388 = vunpack.c.h.b16 %v58
  %v389 = vunpack.c.l.b16 %v59
  %v390 = vunpack.c.h.b16 %v59
  %v391 = vunpack.c.l.b16 %v60
  %v392 = vunpack.c.h.b16 %v60
  %v393 = vunpack.c.l.b16 %v61
  %v394 = vunpack.c.h.b16 %v61
  %v395 = vunpack.c.l.b16 %v62
  %v396 = vunpack.c.h.b16 %v62
  %v397 = vunpack.c.l.b16 %v63
  %v398 = vunpack.c.h.b16 %v63
  %v399 = vunpack.c.l.b16 %v64
  %v400 = vunpack.c.h.b16 %v64
  %v401 = vpack.c.b16 %v317, %v305
  %v402 = vpack.c.b16 %v318, %v306
  %v403 = vpack.c.b16 %v319, %v307
  %v404 = vpack.c.b16 %v320, %v308
  %v405 = vpack.c.b16 %v321, %v309
  %v406 = vpack.c.b16 %v322, %v310
  %v407 = vpack.c.b16 %v323, %v311
  %v408 = vpack.c.b16 %v324, %v312
  %v409 = vpack.c.b16 %v325, %v313
  %v410 = vpack.c.b16 %v326, %v314
  %v411 = vpack.c.b16 %v327, %v315
  %v412 = vpack.c.b16 %v328, %v316
  %v413 = vpack.c.b16 %v341, %v329
  %v414 = vpack.c.b16 %v342, %v330
  %v415 = vpack.c.b16 %v343, %v331
  %v416 = vpack.c.b16 %v344, %v332
  %v417 = vpack.c.b16 %v345, %v333
  %v418 = vpack.c.b16 %v346, %v334
  %v419 = vpack.c.b16 %v347, %v335
  %v420 = vpack.c.b16 %v348, %v336
  %v421 = vpack.c.b16 %v349, %v337
  %v422 = vpack.c.b16 %v350, %v338
  %v423 = vpack.c.b16 %v351, %v339
  %v424 = vpack.c.b16 %v352, %v340
  %v425 = vpack.c.b16 %v365, %v353
  %v426 = vpack.c.b16 %v366, %v354
  %v427 = vpack.c.b16 %v367, %v355
  %v428 = vpack.c.b16 %v368, %v356
  %v429 = vpack.c.b16 %v369, %v357
  %v430 = vpack.c.b16 %v370, %v358
  %v431 = vpack.c.b16 %v371, %v359
  %v432 = vpack.c.b16 %v372, %v360
  %v433 = vpack.c.b16 %v373, %v361
  %v434 = vpack.c.b16 %v374, %v362
  %v435 = vpack.c.b16 %v375, %v363
  %v436 = vpack.c.b16 %v376, %v364
  %v437 = vpack.c.b16 %v389, %v377
  %v438 = vpack.c.b16 %v390, %v378
  %v439 = vpack.c.b16 %v391, %v379
  %v440 = vpack.c.b16 %v392, %v380
  %v441 = vpack.c.b16 %v393, %v381
  %v442 = vpack.c.b16 %v394, %v382
  %v443 = vpack.c.b16 %v395, %v383
  %v444 = vpack.c.b16 %v396, %v384
  %v445 = vpack.c.b16 %v397, %v385
  %v446 = vpack.c.b16 %v398, %v386
  %v447 = vpack.c.b16 %v399, %v387
  %v448 = vpack.c.b16 %v400, %v388
  %v689 = vunpack.c.l.b16 %v65
  %v690 = vunpack.c.l.b16 %v66
  %v691 = vunpack.c.l.b16 %v67
  %v692 = vunpack.c.l.b16 %v68
  %v693 = vunpack.c.l.b16 %v69
  %v694 = vunpack.c.l.b16 %v70
  %v695 = vunpack.c.l.b16 %v71
  %v696 = vunpack.c.l.b16 %v72
  %v697 = vunpack.c.l.b16 %v73
  %v698 = vunpack.c.l.b16 %v74
  %v699 = vunpack.c.l.b16 %v75
  %v700 = vunpack.c.l.b16 %v76
  %v701 = vunpack.c.l.b16 %v77
  %v702 = vunpack.c.l.b16 %v78
  %v703 = vunpack.c.l.b16 %v79
  %v704 = vunpack.c.l.b16 %v80
  %v705 = vunpack.c.l.b16 %v81
  %v706 = vunpack.c.l.b16 %v82
  %v707 = vunpack.c.l.b16 %v83
  %v708 = vunpack.c.l.b16 %v84
  %v709 = vunpack.c.l.b16 %v85
  %v710 = vunpack.c.l.b16 %v86
  %v711 = vunpack.c.l.b16 %v87
  %v712 = vunpack.c.l.b16 %v88
  %v713 = vunpack.c.l.b16 %v89
  %v714 = vunpack.c.l.b16 %v90
  %v715 = vunpack.c.l.b16 %v91
  %v716 = vunpack.c.l.b16 %v92
  %v717 = vunpack.c.l.b16 %v93
  %v718 = vunpack.c.l.b16 %v94
  %v719 = vunpack.c.l.b16 %v95
  %v720 = vunpack.c.l.b16 %v96
  %v721 = vunpack.c.l.b16 %v97
  %v722 = vunpack.c.l.b16 %v98
  %v723 = vunpack.c.l.b16 %v99
  %v724 = vunpack.c.l.b16 %v100
  %v725 = vunpack.c.l.b16 %v101
  %v726 = vunpack.c.l.b16 %v102
  %v727 = vunpack.c.l.b16 %v103
  %v728 = vunpack.c.l.b16 %v104
  %v729 = vunpack.c.l.b16 %v105
  %v730 = vunpack.c.l.b16 %v106
  %v731 = vunpack.c.l.b16 %v107
  %v732 = vunpack.c.l.b16 %v108
  %v733 = vunpack.c.l.b16 %v109
  %v734 = vunpack.c.l.b16 %v110
  %v735 = vunpack.c.l.b16 %v111
  %v736 = vunpack.c.l.b16 %v112
  %v737 = vunpack.c.l.b16 %v113
  %v738 = vunpack.c.l.b16 %v114
  %v739 = vunpack.c.l.b16 %v115
  %v740 = vunpack.c.l.b16 %v116
  %v741 = vunpack.c.l.b16 %v117
  %v742 = vunpack.c.l.b16 %v118
  %v743 = vunpack.c.l.b16 %v119
  %v744 = vunpack.c.l.b16 %v120
  %v745 = vunpack.c.l.b16 %v121
  %v746 = vunpack.c.l.b16 %v122
  %v747 = vunpack.c.l.b16 %v123
  %v748 = vunpack.c.l.b16 %v124
  %v749 = vunpack.c.l.b16 %v125
  %v750 = vunpack.c.l.b16 %v126
  %v751 = vunpack.c.l.b16 %v127
  %v752 = vunpack.c.l.b16 %v128
  %v753 = vunpack.c.l.b16 %v129
  %v754 = vunpack.c.l.b16 %v130
  %v755 = vunpack.c.l.b16 %v131
  %v756 = vunpack.c.l.b16 %v132
  %v757 = vunpack.c.l.b16 %v133
  %v758 = vunpack.c.l.b16 %v134
  %v759 = vunpack.c.l.b16 %v135
  %v760 = vunpack.c.l.b16 %v136
  %v761 = vunpack.c.l.b16 %v137
  %v762 = vunpack.c.l.b16 %v138
  %v763 = vunpack.c.l.b16 %v139
  %v764 = vunpack.c.l.b16 %v140
  %v765 = vunpack.c.l.b16 %v141
  %v766 = vunpack.c.l.b16 %v142
  %v767 = vunpack.c.l.b16 %v143
  %v768 = vunpack.c.l.b16 %v144
  %v769 = vunpack.c.l.b16 %v145
  %v770 = vunpack.c.l.b16 %v146
  %v771 = vunpack.c.l.b16 %v147
  %v772 = vunpack.c.l.b16 %v148
  %v773 = vunpack.c.l.b16 %v149
  %v774 = vunpack.c.l.b16 %v150
  %v775 = vunpack.c.l.b16 %v151
  %v776 = vunpack.c.l.b16 %v152
  %v777 = vunpack.c.l.b16 %v153
  %v778 = vunpack.c.l.b16 %v154
  %v779 = vunpack.c.l.b16 %v155
  %v780 = vunpack.c.l.b16 %v156
  %v781 = vunpack.c.l.b16 %v157
  %v782 = vunpack.c.l.b16 %v158
  %v783 = vunpack.c.l.b16 %v159
  %v784 = vunpack.c.l.b16 %v160
  %v785 = vunpack.c.l.b16 %v161
  %v786 = vunpack.c.l.b16 %v162
  %v787 = vunpack.c.l.b16 %v163
  %v788 = vunpack.c.l.b16 %v164
  %v789 = vunpack.c.l.b16 %v165
  %v790 = vunpack.c.l.b16 %v166
  %v791 = vunpack.c.l.b16 %v167
  %v792 = vunpack.c.l.b16 %v168
  %v793 = vunpack.c.l.b16 %v169
  %v794 = vunpack.c.l.b16 %v170
  %v795 = vunpack.c.l.b16 %v171
  %v796 = vunpack.c.l.b16 %v172
  %v797 = vunpack.c.l.b16 %v173
  %v798 = vunpack.c.l.b16 %v174
  %v799 = vunpack.c.l.b16 %v175
  %v800 = vunpack.c.l.b16 %v176
  %v801 = vunpack.c.l.b16 %v177
  %v802 = vunpack.c.l.b16 %v178
  %v803 = vunpack.c.l.b16 %v179
  %v804 = vunpack.c.l.b16 %v180
  %v805 = vunpack.c.l.b16 %v181
  %v806 = vunpack.c.l.b16 %v182
  %v807 = vunpack.c.l.b16 %v183
  %v808 = vunpack.c.l.b16 %v184
  %v809 = vunpack.c.l.b16 %v185
  %v810 = vunpack.c.l.b16 %v186
  %v811 = vunpack.c.l.b16 %v187
  %v812 = vunpack.c.l.b16 %v188
  %v813 = vunpack.c.l.b16 %v189
  %v814 = vunpack.c.l.b16 %v190
  %v815 = vunpack.c.l.b16 %v191
  %v816 = vunpack.c.l.b16 %v192
  %v817 = vunpack.c.l.b16 %v193
  %v818 = vunpack.c.l.b16 %v194
  %v819 = vunpack.c.l.b16 %v195
  %v820 = vunpack.c.l.b16 %v196
  %v821 = vunpack.c.l.b16 %v197
  %v822 = vunpack.c.l.b16 %v198
  %v823 = vunpack.c.l.b16 %v199
  %v824 = vunpack.c.l.b16 %v200
  %v825 = vunpack.c.l.b16 %v201
  %v826 = vunpack.c.l.b16 %v202
  %v827 = vunpack.c.l.b16 %v203
  %v828 = vunpack.c.l.b16 %v204
  %v829 = vunpack.c.l.b16 %v205
  %v830 = vunpack.c.l.b16 %v206
  %v831 = vunpack.c.l.b16 %v207
  %v832 = vunpack.c.l.b16 %v208
  %v833 = vunpack.c.l.b16 %v209
  %v834 = vunpack.c.l.b16 %v210
  %v835 = vunpack.c.l.b16 %v211
  %v836 = vunpack.c.l.b16 %v212
  %v837 = vunpack.c.l.b16 %v213
  %v838 = vunpack.c.l.b16 %v214
  %v839 = vunpack.c.l.b16 %v215
  %v840 = vunpack.c.l.b16 %v216
  %v841 = vunpack.c.l.b16 %v217
  %v842 = vunpack.c.l.b16 %v218
  %v843 = vunpack.c.l.b16 %v219
  %v844 = vunpack.c.l.b16 %v220
  %v845 = vunpack.c.l.b16 %v221
  %v846 = vunpack.c.l.b16 %v222
  %v847 = vunpack.c.l.b16 %v223
  %v848 = vunpack.c.l.b16 %v224
  %v849 = vunpack.c.l.b16 %v225
  %v850 = vunpack.c.l.b16 %v226
  %v851 = vunpack.c.l.b16 %v227
  %v852 = vunpack.c.l.b16 %v228
  %v853 = vunpack.c.l.b16 %v229
  %v854 = vunpack.c.l.b16 %v230
  %v855 = vunpack.c.l.b16 %v231
  %v856 = vunpack.c.l.b16 %v232
  %v857 = vunpack.c.l.b16 %v233
  %v858 = vunpack.c.l.b16 %v234
  %v859 = vunpack.c.l.b16 %v235
  %v860 = vunpack.c.l.b16 %v236
  %v861 = vunpack.c.l.b16 %v237
  %v862 = vunpack.c.l.b16 %v238
  %v863 = vunpack.c.l.b16 %v239
  %v864 = vunpack.c.l.b16 %v240
  %v865 = vunpack.c.l.b16 %v241
  %v866 = vunpack.c.l.b16 %v242
  %v867 = vunpack.c.l.b16 %v243
  %v868 = vunpack.c.l.b16 %v244
  %v869 = vunpack.c.l.b16 %v245
  %v870 = vunpack.c.l.b16 %v246
  %v871 = vunpack.c.l.b16 %v247
  %v872 = vunpack.c.l.b16 %v248
  %v873 = vunpack.c.l.b16 %v249
  %v874 = vunpack.c.l.b16 %v250
  %v875 = vunpack.c.l.b16 %v251
  %v876 = vunpack.c.l.b16 %v252
  %v877 = vunpack.c.l.b16 %v253
  %v878 = vunpack.c.l.b16 %v254
  %v879 = vunpack.c.l.b16 %v255
  %v880 = vunpack.c.l.b16 %v256
  %v881 = vpack.c.b16 %v690, %v689
  %v882 = vpack.c.b16 %v692, %v691
  %v883 = vpack.c.b16 %v694, %v693
  %v884 = vpack.c.b16 %v696, %v695
  %v885 = vpack.c.b16 %v698, %v697
  %v886 = vpack.c.b16 %v700, %v699
  %v887 = vpack.c.b16 %v702, %v701
  %v888 = vpack.c.b16 %v704, %v703
  %v889 = vpack.c.b16 %v706, %v705
  %v890 = vpack.c.b16 %v708, %v707
  %v891 = vpack.c.b16 %v710, %v709
  %v892 = vpack.c.b16 %v712, %v711
  %v893 = vpack.c.b16 %v714, %v713
  %v894 = vpack.c.b16 %v716, %v715
  %v895 = vpack.c.b16 %v718, %v717
  %v896 = vpack.c.b16 %v720, %v719
  %v897 = vpack.c.b16 %v722, %v721
  %v898 = vpack.c.b16 %v724, %v723
  %v899 = vpack.c.b16 %v726, %v725
  %v900 = vpack.c.b16 %v728, %v727
  %v901 = vpack.c.b16 %v730, %v729
  %v902 = vpack.c.b16 %v732, %v731
  %v903 = vpack.c.b16 %v734, %v733
  %v904 = vpack.c.b16 %v736, %v735
  %v905 = vpack.c.b16 %v738, %v737
  %v906 = vpack.c.b16 %v740, %v739
  %v907 = vpack.c.b16 %v742, %v741
  %v908 = vpack.c.b16 %v744, %v743
  %v909 = vpack.c.b16 %v746, %v745
  %v910 = vpack.c.b16 %v748, %v747
  %v911 = vpack.c.b16 %v750, %v749
  %v912 = vpack.c.b16 %v752, %v751
  %v913 = vpack.c.b16 %v754, %v753
  %v914 = vpack.c.b16 %v756, %v755
  %v915 = vpack.c.b16 %v758, %v757
  %v916 = vpack.c.b16 %v760, %v759
  %v917 = vpack.c.b16 %v762, %v761
  %v918 = vpack.c.b16 %v764, %v763
  %v919 = vpack.c.b16 %v766, %v765
  %v920 = vpack.c.b16 %v768, %v767
  %v921 = vpack.c.b16 %v770, %v769
  %v922 = vpack.c.b16 %v772, %v771
  %v923 = vpack.c.b16 %v774, %v773
  %v924 = vpack.c.b16 %v776, %v775
  %v925 = vpack.c.b16 %v778, %v777
  %v926 = vpack.c.b16 %v780, %v779
  %v927 = vpack.c.b16 %v782, %v781
  %v928 = vpack.c.b16 %v784, %v783
  %v929 = vpack.c.b16 %v786, %v785
  %v930 = vpack.c.b16 %v788, %v787
  %v931 = vpack.c.b16 %v790, %v789
  %v932 = vpack.c.b16 %v792, %v791
  %v933 = vpack.c.b16 %v794, %v793
  %v934 = vpack.c.b16 %v796, %v795
  %v935 = vpack.c.b16 %v798, %v797
  %v936 = vpack.c.b16 %v800, %v799
  %v937 = vpack.c.b16 %v802, %v801
  %v938 = vpack.c.b16 %v804, %v803
  %v939 = vpack.c.b16 %v806, %v805
  %v940 = vpack.c.b16 %v808, %v807
  %v941 = vpack.c.b16 %v810, %v809
  %v942 = vpack.c.b16 %v812, %v811
  %v943 = vpack.c.b16 %v814, %v813
  %v944 = vpack.c.b16 %v816, %v815
  %v945 = vpack.c.b16 %v818, %v817
  %v946 = vpack.c.b16 %v820, %v819
  %v947 = vpack.c.b16 %v822, %v821
  %v948 = vpack.c.b16 %v824, %v823
  %v949 = vpack.c.b16 %v826, %v825
  %v950 = vpack.c.b16 %v828, %v827
  %v951 = vpack.c.b16 %v830, %v829
  %v952 = vpack.c.b16 %v832, %v831
  %v953 = vpack.c.b16 %v834, %v833
  %v954 = vpack.c.b16 %v836, %v835
  %v955 = vpack.c.b16 %v838, %v837
  %v956 = vpack.c.b16 %v840, %v839
  %v957 = vpack.c.b16 %v842, %v841
  %v958 = vpack.c.b16 %v844, %v843
  %v959 = vpack.c.b16 %v846, %v845
  %v960 = vpack.c.b16 %v848, %v847
  %v961 = vpack.c.b16 %v850, %v849
  %v962 = vpack.c.b16 %v852, %v851
  %v963 = vpack.c.b16 %v854, %v853
  %v964 = vpack.c.b16 %v856, %v855
  %v965 = vpack.c.b16 %v858, %v857
  %v966 = vpack.c.b16 %v860, %v859
  %v967 = vpack.c.b16 %v862, %v861
  %v968 = vpack.c.b16 %v864, %v863
  %v969 = vpack.c.b16 %v866, %v865
  %v970 = vpack.c.b16 %v868, %v867
  %v971 = vpack.c.b16 %v870, %v869
  %v972 = vpack.c.b16 %v872, %v871
  %v973 = vpack.c.b16 %v874, %v873
  %v974 = vpack.c.b16 %v876, %v875
  %v975 = vpack.c.b16 %v878, %v877
  %v976 = vpack.c.b16 %v880, %v879
  %1073 = vmatprep.subr.bf16.mxu0 0
  %1074 = vmatpush1.bf16.msra.mxu0 %v881
  %1075 = vmatprep.subr.bf16.mxu0 0
  %1076 = vmatpush1.bf16.msra.mxu0 %v882
  %1077 = vmatprep.subr.bf16.mxu0 0
  %1078 = vmatpush1.bf16.msra.mxu0 %v883
  %1079 = vmatprep.subr.bf16.mxu0 0
  %1080 = vmatpush1.bf16.msra.mxu0 %v884
  %1081 = vmatprep.subr.bf16.mxu0 0
  %1082 = vmatpush1.bf16.msra.mxu0 %v885
  %1083 = vmatprep.subr.bf16.mxu0 0
  %1084 = vmatpush1.bf16.msra.mxu0 %v886
  %1085 = vmatprep.subr.bf16.mxu0 0
  %1086 = vmatpush1.bf16.msra.mxu0 %v887
  %1087 = vmatprep.subr.bf16.mxu0 0
  %1088 = vmatpush1.bf16.msra.mxu0 %v888
  %1089 = vmatprep.subr.bf16.mxu0 0
  %1090 = vmatpush1.bf16.msra.mxu0 %v889
  %1091 = vmatprep.subr.bf16.mxu0 0
  %1092 = vmatpush1.bf16.msra.mxu0 %v890
  %1093 = vmatprep.subr.bf16.mxu0 0
  %1094 = vmatpush1.bf16.msra.mxu0 %v891
  %1095 = vmatprep.subr.bf16.mxu0 0
  %1096 = vmatpush1.bf16.msra.mxu0 %v892
  %1097 = vmatprep.subr.bf16.mxu0 0
  %1098 = vmatpush1.bf16.msra.mxu0 %v893
  %1099 = vmatprep.subr.bf16.mxu0 0
  %1100 = vmatpush1.bf16.msra.mxu0 %v894
  %1101 = vmatprep.subr.bf16.mxu0 0
  %1102 = vmatpush1.bf16.msra.mxu0 %v895
  %1103 = vmatprep.subr.bf16.mxu0 0
  %1104 = vmatpush1.bf16.msra.mxu0 %v896
  %1105 = vmatprep.mubr.bf16.mxu0 %v402
  %1106 = vmatmul.mubr.bf16.gmra.mrb[0].mxu0 %v401
  %v1107 = vpop.f32.mrb[0].mxu0
  %v1108 = vadd.f32 0.0, %v1107
  %v1109 = vpop.f32.mrb[0].mxu0
  %v1110 = vpop.f32.mrb[0].mxu0
  %v1111 = vadd.f32 0.0, %v1110
  %v1112 = vpop.f32.mrb[0].mxu0
  %1113 = vmatprep.mubr.bf16.mxu0 %v414
  %1114 = vmatmul.mubr.bf16.gmra.mrb[0].mxu0 %v413
  %v1115 = vpop.f32.mrb[0].mxu0
  %v1116 = vadd.f32 0.0, %v1115
  %v1117 = vpop.f32.mrb[0].mxu0
  %v1118 = vpop.f32.mrb[0].mxu0
  %v1119 = vadd.f32 0.0, %v1118
  %v1120 = vpop.f32.mrb[0].mxu0
  %1121 = vmatprep.mubr.bf16.mxu0 %v426
  %1122 = vmatmul.mubr.bf16.gmra.mrb[0].mxu0 %v425
  %v1123 = vpop.f32.mrb[0].mxu0
  %v1124 = vadd.f32 0.0, %v1123
  %v1125 = vpop.f32.mrb[0].mxu0
  %v1126 = vpop.f32.mrb[0].mxu0
  %v1127 = vadd.f32 0.0, %v1126
  %v1128 = vpop.f32.mrb[0].mxu0
  %1129 = vmatprep.mubr.bf16.mxu0 %v438
  %1130 = vmatmul.mubr.bf16.gmra.mrb[0].mxu0 %v437
  %v1131 = vpop.f32.mrb[0].mxu0
  %v1132 = vadd.f32 0.0, %v1131
  %v1133 = vpop.f32.mrb[0].mxu0
  %v1134 = vpop.f32.mrb[0].mxu0
  %v1135 = vadd.f32 0.0, %v1134
  %v1136 = vpop.f32.mrb[0].mxu0
  %1137 = vdwg.mxu0
  %1138 = vmatprep.subr.bf16.mxu0 0
  %1139 = vmatpush1.bf16.msra.mxu0 %v897
  %1140 = vmatprep.subr.bf16.mxu0 0
  %1141 = vmatpush1.bf16.msra.mxu0 %v898
  %1142 = vmatprep.subr.bf16.mxu0 0
  %1143 = vmatpush1.bf16.msra.mxu0 %v899
  %1144 = vmatprep.subr.bf16.mxu0 0
  %1145 = vmatpush1.bf16.msra.mxu0 %v900
  %1146 = vmatprep.subr.bf16.mxu0 0
  %1147 = vmatpush1.bf16.msra.mxu0 %v901
  %1148 = vmatprep.subr.bf16.mxu0 0
  %1149 = vmatpush1.bf16.msra.mxu0 %v902
  %1150 = vmatprep.subr.bf16.mxu0 0
  %1151 = vmatpush1.bf16.msra.mxu0 %v903
  %1152 = vmatprep.subr.bf16.mxu0 0
  %1153 = vmatpush1.bf16.msra.mxu0 %v904
  %1154 = vmatprep.subr.bf16.mxu0 0
  %1155 = vmatpush1.bf16.msra.mxu0 %v905
  %1156 = vmatprep.subr.bf16.mxu0 0
  %1157 = vmatpush1.bf16.msra.mxu0 %v906
  %1158 = vmatprep.subr.bf16.mxu0 0
  %1159 = vmatpush1.bf16.msra.mxu0 %v907
  %1160 = vmatprep.subr.bf16.mxu0 0
  %1161 = vmatpush1.bf16.msra.mxu0 %v908
  %1162 = vmatprep.subr.bf16.mxu0 0
  %1163 = vmatpush1.bf16.msra.mxu0 %v909
  %1164 = vmatprep.subr.bf16.mxu0 0
  %1165 = vmatpush1.bf16.msra.mxu0 %v910
  %1166 = vmatprep.subr.bf16.mxu0 0
  %1167 = vmatpush1.bf16.msra.mxu0 %v911
  %1168 = vmatprep.subr.bf16.mxu0 0
  %1169 = vmatpush1.bf16.msra.mxu0 %v912
  %1170 = vmatprep.mubr.bf16.mxu0 %v404
  %1171 = vmatmul.mubr.bf16.gmra.mrb[0].mxu0 %v403
  %v1172 = vpop.f32.mrb[0].mxu0
  %v1173 = vadd.f32 %v1108, %v1172
  %v1174 = vpop.f32.mrb[0].mxu0
  %v1175 = vpop.f32.mrb[0].mxu0
  %v1176 = vadd.f32 %v1111, %v1175
  %v1177 = vpop.f32.mrb[0].mxu0
  %1178 = vmatprep.mubr.bf16.mxu0 %v416
  %1179 = vmatmul.mubr.bf16.gmra.mrb[0].mxu0 %v415
  %v1180 = vpop.f32.mrb[0].mxu0
  %v1181 = vadd.f32 %v1116, %v1180
  %v1182 = vpop.f32.mrb[0].mxu0
  %v1183 = vpop.f32.mrb[0].mxu0
  %v1184 = vadd.f32 %v1119, %v1183
  %v1185 = vpop.f32.mrb[0].mxu0
  %1186 = vmatprep.mubr.bf16.mxu0 %v428
  %1187 = vmatmul.mubr.bf16.gmra.mrb[0].mxu0 %v427
  %v1188 = vpop.f32.mrb[0].mxu0
  %v1189 = vadd.f32 %v1124, %v1188
  %v1190 = vpop.f32.mrb[0].mxu0
  %v1191 = vpop.f32.mrb[0].mxu0
  %v1192 = vadd.f32 %v1127, %v1191
  %v1193 = vpop.f32.mrb[0].mxu0
  %1194 = vmatprep.mubr.bf16.mxu0 %v440
  %1195 = vmatmul.mubr.bf16.gmra.mrb[0].mxu0 %v439
  %v1196 = vpop.f32.mrb[0].mxu0
  %v1197 = vadd.f32 %v1132, %v1196
  %v1198 = vpop.f32.mrb[0].mxu0
  %v1199 = vpop.f32.mrb[0].mxu0
  %v1200 = vadd.f32 %v1135, %v1199
  %v1201 = vpop.f32.mrb[0].mxu0
  %1202 = vdwg.mxu0
  %1203 = vmatprep.subr.bf16.mxu0 0
  %1204 = vmatpush1.bf16.msra.mxu0 %v913
  %1205 = vmatprep.subr.bf16.mxu0 0
  %1206 = vmatpush1.bf16.msra.mxu0 %v914
  %1207 = vmatprep.subr.bf16.mxu0 0
  %1208 = vmatpush1.bf16.msra.mxu0 %v915
  %1209 = vmatprep.subr.bf16.mxu0 0
  %1210 = vmatpush1.bf16.msra.mxu0 %v916
  %1211 = vmatprep.subr.bf16.mxu0 0
  %1212 = vmatpush1.bf16.msra.mxu0 %v917
  %1213 = vmatprep.subr.bf16.mxu0 0
  %1214 = vmatpush1.bf16.msra.mxu0 %v918
  %1215 = vmatprep.subr.bf16.mxu0 0
  %1216 = vmatpush1.bf16.msra.mxu0 %v919
  %1217 = vmatprep.subr.bf16.mxu0 0
  %1218 = vmatpush1.bf16.msra.mxu0 %v920
  %1219 = vmatprep.subr.bf16.mxu0 0
  %1220 = vmatpush1.bf16.msra.mxu0 %v921
  %1221 = vmatprep.subr.bf16.mxu0 0
  %1222 = vmatpush1.bf16.msra.mxu0 %v922
  %1223 = vmatprep.subr.bf16.mxu0 0
  %1224 = vmatpush1.bf16.msra.mxu0 %v923
  %1225 = vmatprep.subr.bf16.mxu0 0
  %1226 = vmatpush1.bf16.msra.mxu0 %v924
  %1227 = vmatprep.subr.bf16.mxu0 0
  %1228 = vmatpush1.bf16.msra.mxu0 %v925
  %1229 = vmatprep.subr.bf16.mxu0 0
  %1230 = vmatpush1.bf16.msra.mxu0 %v926
  %1231 = vmatprep.subr.bf16.mxu0 0
  %1232 = vmatpush1.bf16.msra.mxu0 %v927
  %1233 = vmatprep.subr.bf16.mxu0 0
  %1234 = vmatpush1.bf16.msra.mxu0 %v928
  %1235 = vmatprep.mubr.bf16.mxu0 %v406
  %1236 = vmatmul.mubr.bf16.gmra.mrb[0].mxu0 %v405
  %v1237 = vpop.f32.mrb[0].mxu0
  %v1238 = vadd.f32 %v1173, %v1237
  %v1239 = vpop.f32.mrb[0].mxu0
  %v1240 = vpop.f32.mrb[0].mxu0
  %v1241 = vadd.f32 %v1176, %v1240
  %v1242 = vpop.f32.mrb[0].mxu0
  %1243 = vmatprep.mubr.bf16.mxu0 %v418
  %1244 = vmatmul.mubr.bf16.gmra.mrb[0].mxu0 %v417
  %v1245 = vpop.f32.mrb[0].mxu0
  %v1246 = vadd.f32 %v1181, %v1245
  %v1247 = vpop.f32.mrb[0].mxu0
  %v1248 = vpop.f32.mrb[0].mxu0
  %v1249 = vadd.f32 %v1184, %v1248
  %v1250 = vpop.f32.mrb[0].mxu0
  %1251 = vmatprep.mubr.bf16.mxu0 %v430
  %1252 = vmatmul.mubr.bf16.gmra.mrb[0].mxu0 %v429
  %v1253 = vpop.f32.mrb[0].mxu0
  %v1254 = vadd.f32 %v1189, %v1253
  %v1255 = vpop.f32.mrb[0].mxu0
  %v1256 = vpop.f32.mrb[0].mxu0
  %v1257 = vadd.f32 %v1192, %v1256
  %v1258 = vpop.f32.mrb[0].mxu0
  %1259 = vmatprep.mubr.bf16.mxu0 %v442
  %1260 = vmatmul.mubr.bf16.gmra.mrb[0].mxu0 %v441
  %v1261 = vpop.f32.mrb[0].mxu0
  %v1262 = vadd.f32 %v1197, %v1261
  %v1263 = vpop.f32.mrb[0].mxu0
  %v1264 = vpop.f32.mrb[0].mxu0
  %v1265 = vadd.f32 %v1200, %v1264
  %v1266 = vpop.f32.mrb[0].mxu0
  %1267 = vdwg.mxu0
  %1268 = vmatprep.subr.bf16.mxu0 0
  %1269 = vmatpush1.bf16.msra.mxu0 %v929
  %1270 = vmatprep.subr.bf16.mxu0 0
  %1271 = vmatpush1.bf16.msra.mxu0 %v930
  %1272 = vmatprep.subr.bf16.mxu0 0
  %1273 = vmatpush1.bf16.msra.mxu0 %v931
  %1274 = vmatprep.subr.bf16.mxu0 0
  %1275 = vmatpush1.bf16.msra.mxu0 %v932
  %1276 = vmatprep.subr.bf16.mxu0 0
  %1277 = vmatpush1.bf16.msra.mxu0 %v933
  %1278 = vmatprep.subr.bf16.mxu0 0
  %1279 = vmatpush1.bf16.msra.mxu0 %v934
  %1280 = vmatprep.subr.bf16.mxu0 0
  %1281 = vmatpush1.bf16.msra.mxu0 %v935
  %1282 = vmatprep.subr.bf16.mxu0 0
  %1283 = vmatpush1.bf16.msra.mxu0 %v936
  %1284 = vmatprep.subr.bf16.mxu0 0
  %1285 = vmatpush1.bf16.msra.mxu0 %v937
  %1286 = vmatprep.subr.bf16.mxu0 0
  %1287 = vmatpush1.bf16.msra.mxu0 %v938
  %1288 = vmatprep.subr.bf16.mxu0 0
  %1289 = vmatpush1.bf16.msra.mxu0 %v939
  %1290 = vmatprep.subr.bf16.mxu0 0
  %1291 = vmatpush1.bf16.msra.mxu0 %v940
  %1292 = vmatprep.subr.bf16.mxu0 0
  %1293 = vmatpush1.bf16.msra.mxu0 %v941
  %1294 = vmatprep.subr.bf16.mxu0 0
  %1295 = vmatpush1.bf16.msra.mxu0 %v942
  %1296 = vmatprep.subr.bf16.mxu0 0
  %1297 = vmatpush1.bf16.msra.mxu0 %v943
  %1298 = vmatprep.subr.bf16.mxu0 0
  %1299 = vmatpush1.bf16.msra.mxu0 %v944
  %1300 = vmatprep.mubr.bf16.mxu0 %v408
  %1301 = vmatmul.mubr.bf16.gmra.mrb[0].mxu0 %v407
  %v1302 = vpop.f32.mrb[0].mxu0
  %v1303 = vadd.f32 %v1238, %v1302
  %v1304 = vpop.f32.mrb[0].mxu0
  %v1305 = vpop.f32.mrb[0].mxu0
  %v1306 = vadd.f32 %v1241, %v1305
  %v1307 = vpop.f32.mrb[0].mxu0
  %1308 = vmatprep.mubr.bf16.mxu0 %v420
  %1309 = vmatmul.mubr.bf16.gmra.mrb[0].mxu0 %v419
  %v1310 = vpop.f32.mrb[0].mxu0
  %v1311 = vadd.f32 %v1246, %v1310
  %v1312 = vpop.f32.mrb[0].mxu0
  %v1313 = vpop.f32.mrb[0].mxu0
  %v1314 = vadd.f32 %v1249, %v1313
  %v1315 = vpop.f32.mrb[0].mxu0
  %1316 = vmatprep.mubr.bf16.mxu0 %v432
  %1317 = vmatmul.mubr.bf16.gmra.mrb[0].mxu0 %v431
  %v1318 = vpop.f32.mrb[0].mxu0
  %v1319 = vadd.f32 %v1254, %v1318
  %v1320 = vpop.f32.mrb[0].mxu0
  %v1321 = vpop.f32.mrb[0].mxu0
  %v1322 = vadd.f32 %v1257, %v1321
  %v1323 = vpop.f32.mrb[0].mxu0
  %1324 = vmatprep.mubr.bf16.mxu0 %v444
  %1325 = vmatmul.mubr.bf16.gmra.mrb[0].mxu0 %v443
  %v1326 = vpop.f32.mrb[0].mxu0
  %v1327 = vadd.f32 %v1262, %v1326
  %v1328 = vpop.f32.mrb[0].mxu0
  %v1329 = vpop.f32.mrb[0].mxu0
  %v1330 = vadd.f32 %v1265, %v1329
  %v1331 = vpop.f32.mrb[0].mxu0
  %1332 = vdwg.mxu0
  %1333 = vmatprep.subr.bf16.mxu0 0
  %1334 = vmatpush1.bf16.msra.mxu0 %v945
  %1335 = vmatprep.subr.bf16.mxu0 0
  %1336 = vmatpush1.bf16.msra.mxu0 %v946
  %1337 = vmatprep.subr.bf16.mxu0 0
  %1338 = vmatpush1.bf16.msra.mxu0 %v947
  %1339 = vmatprep.subr.bf16.mxu0 0
  %1340 = vmatpush1.bf16.msra.mxu0 %v948
  %1341 = vmatprep.subr.bf16.mxu0 0
  %1342 = vmatpush1.bf16.msra.mxu0 %v949
  %1343 = vmatprep.subr.bf16.mxu0 0
  %1344 = vmatpush1.bf16.msra.mxu0 %v950
  %1345 = vmatprep.subr.bf16.mxu0 0
  %1346 = vmatpush1.bf16.msra.mxu0 %v951
  %1347 = vmatprep.subr.bf16.mxu0 0
  %1348 = vmatpush1.bf16.msra.mxu0 %v952
  %1349 = vmatprep.subr.bf16.mxu0 0
  %1350 = vmatpush1.bf16.msra.mxu0 %v953
  %1351 = vmatprep.subr.bf16.mxu0 0
  %1352 = vmatpush1.bf16.msra.mxu0 %v954
  %1353 = vmatprep.subr.bf16.mxu0 0
  %1354 = vmatpush1.bf16.msra.mxu0 %v955
  %1355 = vmatprep.subr.bf16.mxu0 0
  %1356 = vmatpush1.bf16.msra.mxu0 %v956
  %1357 = vmatprep.subr.bf16.mxu0 0
  %1358 = vmatpush1.bf16.msra.mxu0 %v957
  %1359 = vmatprep.subr.bf16.mxu0 0
  %1360 = vmatpush1.bf16.msra.mxu0 %v958
  %1361 = vmatprep.subr.bf16.mxu0 0
  %1362 = vmatpush1.bf16.msra.mxu0 %v959
  %1363 = vmatprep.subr.bf16.mxu0 0
  %1364 = vmatpush1.bf16.msra.mxu0 %v960
  %1365 = vmatprep.mubr.bf16.mxu0 %v410
  %1366 = vmatmul.mubr.bf16.gmra.mrb[0].mxu0 %v409
  %v1367 = vpop.f32.mrb[0].mxu0
  %v1368 = vadd.f32 %v1303, %v1367
  %v1369 = vpop.f32.mrb[0].mxu0
  %v1370 = vpop.f32.mrb[0].mxu0
  %v1371 = vadd.f32 %v1306, %v1370
  %v1372 = vpop.f32.mrb[0].mxu0
  %1373 = vmatprep.mubr.bf16.mxu0 %v422
  %1374 = vmatmul.mubr.bf16.gmra.mrb[0].mxu0 %v421
  %v1375 = vpop.f32.mrb[0].mxu0
  %v1376 = vadd.f32 %v1311, %v1375
  %v1377 = vpop.f32.mrb[0].mxu0
  %v1378 = vpop.f32.mrb[0].mxu0
  %v1379 = vadd.f32 %v1314, %v1378
  %v1380 = vpop.f32.mrb[0].mxu0
  %1381 = vmatprep.mubr.bf16.mxu0 %v434
  %1382 = vmatmul.mubr.bf16.gmra.mrb[0].mxu0 %v433
  %v1383 = vpop.f32.mrb[0].mxu0
  %v1384 = vadd.f32 %v1319, %v1383
  %v1385 = vpop.f32.mrb[0].mxu0
  %v1386 = vpop.f32.mrb[0].mxu0
  %v1387 = vadd.f32 %v1322, %v1386
  %v1388 = vpop.f32.mrb[0].mxu0
  %1389 = vmatprep.mubr.bf16.mxu0 %v446
  %1390 = vmatmul.mubr.bf16.gmra.mrb[0].mxu0 %v445
  %v1391 = vpop.f32.mrb[0].mxu0
  %v1392 = vadd.f32 %v1327, %v1391
  %v1393 = vpop.f32.mrb[0].mxu0
  %v1394 = vpop.f32.mrb[0].mxu0
  %v1395 = vadd.f32 %v1330, %v1394
  %v1396 = vpop.f32.mrb[0].mxu0
  %1397 = vdwg.mxu0
  %1398 = vmatprep.subr.bf16.mxu0 0
  %1399 = vmatpush1.bf16.msra.mxu0 %v961
  %1400 = vmatprep.subr.bf16.mxu0 0
  %1401 = vmatpush1.bf16.msra.mxu0 %v962
  %1402 = vmatprep.subr.bf16.mxu0 0
  %1403 = vmatpush1.bf16.msra.mxu0 %v963
  %1404 = vmatprep.subr.bf16.mxu0 0
  %1405 = vmatpush1.bf16.msra.mxu0 %v964
  %1406 = vmatprep.subr.bf16.mxu0 0
  %1407 = vmatpush1.bf16.msra.mxu0 %v965
  %1408 = vmatprep.subr.bf16.mxu0 0
  %1409 = vmatpush1.bf16.msra.mxu0 %v966
  %1410 = vmatprep.subr.bf16.mxu0 0
  %1411 = vmatpush1.bf16.msra.mxu0 %v967
  %1412 = vmatprep.subr.bf16.mxu0 0
  %1413 = vmatpush1.bf16.msra.mxu0 %v968
  %1414 = vmatprep.subr.bf16.mxu0 0
  %1415 = vmatpush1.bf16.msra.mxu0 %v969
  %1416 = vmatprep.subr.bf16.mxu0 0
  %1417 = vmatpush1.bf16.msra.mxu0 %v970
  %1418 = vmatprep.subr.bf16.mxu0 0
  %1419 = vmatpush1.bf16.msra.mxu0 %v971
  %1420 = vmatprep.subr.bf16.mxu0 0
  %1421 = vmatpush1.bf16.msra.mxu0 %v972
  %1422 = vmatprep.subr.bf16.mxu0 0
  %1423 = vmatpush1.bf16.msra.mxu0 %v973
  %1424 = vmatprep.subr.bf16.mxu0 0
  %1425 = vmatpush1.bf16.msra.mxu0 %v974
  %1426 = vmatprep.subr.bf16.mxu0 0
  %1427 = vmatpush1.bf16.msra.mxu0 %v975
  %1428 = vmatprep.subr.bf16.mxu0 0
  %1429 = vmatpush1.bf16.msra.mxu0 %v976
  %1430 = vmatprep.mubr.bf16.mxu0 %v412
  %1431 = vmatmul.mubr.bf16.gmra.mrb[0].mxu0 %v411
  %v1432 = vpop.f32.mrb[0].mxu0
  %v1433 = vadd.f32 %v1368, %v1432
  %v1434 = vpop.f32.mrb[0].mxu0
  %v1435 = vpop.f32.mrb[0].mxu0
  %v1436 = vadd.f32 %v1371, %v1435
  %v1437 = vpop.f32.mrb[0].mxu0
  %1438 = vmatprep.mubr.bf16.mxu0 %v424
  %1439 = vmatmul.mubr.bf16.gmra.mrb[0].mxu0 %v423
  %v1440 = vpop.f32.mrb[0].mxu0
  %v1441 = vadd.f32 %v1376, %v1440
  %v1442 = vpop.f32.mrb[0].mxu0
  %v1443 = vpop.f32.mrb[0].mxu0
  %v1444 = vadd.f32 %v1379, %v1443
  %v1445 = vpop.f32.mrb[0].mxu0
  %1446 = vmatprep.mubr.bf16.mxu0 %v436
  %1447 = vmatmul.mubr.bf16.gmra.mrb[0].mxu0 %v435
  %v1448 = vpop.f32.mrb[0].mxu0
  %v1449 = vadd.f32 %v1384, %v1448
  %v1450 = vpop.f32.mrb[0].mxu0
  %v1451 = vpop.f32.mrb[0].mxu0
  %v1452 = vadd.f32 %v1387, %v1451
  %v1453 = vpop.f32.mrb[0].mxu0
  %1454 = vmatprep.mubr.bf16.mxu0 %v448
  %1455 = vmatmul.mubr.bf16.gmra.mrb[0].mxu0 %v447
  %v1456 = vpop.f32.mrb[0].mxu0
  %v1457 = vadd.f32 %v1392, %v1456
  %v1458 = vpop.f32.mrb[0].mxu0
  %v1459 = vpop.f32.mrb[0].mxu0
  %v1460 = vadd.f32 %v1395, %v1459
  %v1461 = vpop.f32.mrb[0].mxu0
  %1462 = vdwg.mxu0
  %v1463 = vpack.c.bf16 %v1436, %v1433
  %v1464 = vpack.c.bf16 %v1444, %v1441
  %v1465 = vpack.c.bf16 %v1452, %v1449
  %v1466 = vpack.c.bf16 %v1460, %v1457
  %v1471 = vunpack.c.l.b16 %v1463
  %v1472 = vunpack.c.h.b16 %v1463
  %v1473 = vunpack.c.l.b16 %v1464
  %v1474 = vunpack.c.h.b16 %v1464
  %v1475 = vunpack.c.l.b16 %v1465
  %v1476 = vunpack.c.h.b16 %v1465
  %v1477 = vunpack.c.l.b16 %v1466
  %v1478 = vunpack.c.h.b16 %v1466
  %v1479 = vpack.c.b16 %v1471, %v1471
  %v1480 = vpack.c.b16 %v1472, %v1472
  %v1481 = vpack.c.b16 %v1473, %v1473
  %v1482 = vpack.c.b16 %v1474, %v1474
  %v1483 = vpack.c.b16 %v1475, %v1475
  %v1484 = vpack.c.b16 %v1476, %v1476
  %v1485 = vpack.c.b16 %v1477, %v1477
  %v1486 = vpack.c.b16 %v1478, %v1478
  %vm1495 = vcmask 257024
  %1496 = vst.msk [vmem:[%s3] sm:$0xf] %vm1495, %v1479
  %1497 = vst.msk [vmem:[%s3 + $0x4] sm:$0xf] %vm1495, %v1480
  %1498 = vst.msk [vmem:[%s3 + $0x8] sm:$0xf] %vm1495, %v1481
  %1499 = vst.msk [vmem:[%s3 + $0xc] sm:$0xf] %vm1495, %v1482
  %1500 = vst.msk [vmem:[%s3 + $0x10] sm:$0xf] %vm1495, %v1483
  %1501 = vst.msk [vmem:[%s3 + $0x14] sm:$0xf] %vm1495, %v1484
  %1502 = vst.msk [vmem:[%s3 + $0x18] sm:$0xf] %vm1495, %v1485
  %1503 = vst.msk [vmem:[%s3 + $0x1c] sm:$0xf] %vm1495, %v1486
  %v1504 = vld [vmem:[%s2] sm:$0xf]
  %v1505 = vld [vmem:[%s2 + $0x4] sm:$0xf]
  %v1506 = vld [vmem:[%s2 + $0x8] sm:$0xf]
  %v1507 = vld [vmem:[%s2 + $0xc] sm:$0xf]
  %v1508 = vld [vmem:[%s2 + $0x10] sm:$0xf]
  %v1509 = vld [vmem:[%s2 + $0x14] sm:$0xf]
  %v1510 = vld [vmem:[%s2 + $0x18] sm:$0xf]
  %v1511 = vld [vmem:[%s2 + $0x1c] sm:$0xf]
  %v1512 = vld [vmem:[%s2 + $0x20] sm:$0xf]
  %v1513 = vld [vmem:[%s2 + $0x24] sm:$0xf]
  %v1514 = vld [vmem:[%s2 + $0x28] sm:$0xf]
  %v1515 = vld [vmem:[%s2 + $0x2c] sm:$0xf]
  %v1516 = vld [vmem:[%s2 + $0x30] sm:$0xf]
  %v1517 = vld [vmem:[%s2 + $0x34] sm:$0xf]
  %v1518 = vld [vmem:[%s2 + $0x38] sm:$0xf]
  %v1519 = vld [vmem:[%s2 + $0x3c] sm:$0xf]
  %v1520 = vld [vmem:[%s2 + $0x40] sm:$0xf]
  %v1521 = vld [vmem:[%s2 + $0x44] sm:$0xf]
  %v1522 = vld [vmem:[%s2 + $0x48] sm:$0xf]
  %v1523 = vld [vmem:[%s2 + $0x4c] sm:$0xf]
  %v1524 = vld [vmem:[%s2 + $0x50] sm:$0xf]
  %v1525 = vld [vmem:[%s2 + $0x54] sm:$0xf]
  %v1526 = vld [vmem:[%s2 + $0x58] sm:$0xf]
  %v1527 = vld [vmem:[%s2 + $0x5c] sm:$0xf]
  %v1528 = vld [vmem:[%s2 + $0x60] sm:$0xf]
  %v1529 = vld [vmem:[%s2 + $0x64] sm:$0xf]
  %v1530 = vld [vmem:[%s2 + $0x68] sm:$0xf]
  %v1531 = vld [vmem:[%s2 + $0x6c] sm:$0xf]
  %v1532 = vld [vmem:[%s2 + $0x70] sm:$0xf]
  %v1533 = vld [vmem:[%s2 + $0x74] sm:$0xf]
  %v1534 = vld [vmem:[%s2 + $0x78] sm:$0xf]
  %v1535 = vld [vmem:[%s2 + $0x7c] sm:$0xf]
  %v1536 = vld [vmem:[%s2 + $0x80] sm:$0xf]
  %v1537 = vld [vmem:[%s2 + $0x84] sm:$0xf]
  %v1538 = vld [vmem:[%s2 + $0x88] sm:$0xf]
  %v1539 = vld [vmem:[%s2 + $0x8c] sm:$0xf]
  %v1540 = vld [vmem:[%s2 + $0x90] sm:$0xf]
  %v1541 = vld [vmem:[%s2 + $0x94] sm:$0xf]
  %v1542 = vld [vmem:[%s2 + $0x98] sm:$0xf]
  %v1543 = vld [vmem:[%s2 + $0x9c] sm:$0xf]
  %v1544 = vld [vmem:[%s2 + $0xa0] sm:$0xf]
  %v1545 = vld [vmem:[%s2 + $0xa4] sm:$0xf]
  %v1546 = vld [vmem:[%s2 + $0xa8] sm:$0xf]
  %v1547 = vld [vmem:[%s2 + $0xac] sm:$0xf]
  %v1548 = vld [vmem:[%s2 + $0xb0] sm:$0xf]
  %v1549 = vld [vmem:[%s2 + $0xb4] sm:$0xf]
  %v1550 = vld [vmem:[%s2 + $0xb8] sm:$0xf]
  %v1551 = vld [vmem:[%s2 + $0xbc] sm:$0xf]
  %v1552 = vld [vmem:[%s2 + $0xc0] sm:$0xf]
  %v1553 = vld [vmem:[%s2 + $0xc4] sm:$0xf]
  %v1554 = vld [vmem:[%s2 + $0xc8] sm:$0xf]
  %v1555 = vld [vmem:[%s2 + $0xcc] sm:$0xf]
  %v1556 = vld [vmem:[%s2 + $0xd0] sm:$0xf]
  %v1557 = vld [vmem:[%s2 + $0xd4] sm:$0xf]
  %v1558 = vld [vmem:[%s2 + $0xd8] sm:$0xf]
  %v1559 = vld [vmem:[%s2 + $0xdc] sm:$0xf]
  %v1560 = vld [vmem:[%s2 + $0xe0] sm:$0xf]
  %v1561 = vld [vmem:[%s2 + $0xe4] sm:$0xf]
  %v1562 = vld [vmem:[%s2 + $0xe8] sm:$0xf]
  %v1563 = vld [vmem:[%s2 + $0xec] sm:$0xf]
  %v1564 = vld [vmem:[%s2 + $0xf0] sm:$0xf]
  %v1565 = vld [vmem:[%s2 + $0xf4] sm:$0xf]
  %v1566 = vld [vmem:[%s2 + $0xf8] sm:$0xf]
  %v1567 = vld [vmem:[%s2 + $0xfc] sm:$0xf]
  %v1568 = vld [vmem:[%s2 + $0x100] sm:$0xf]
  %v1569 = vld [vmem:[%s2 + $0x104] sm:$0xf]
  %v1570 = vld [vmem:[%s2 + $0x108] sm:$0xf]
  %v1571 = vld [vmem:[%s2 + $0x10c] sm:$0xf]
  %v1572 = vld [vmem:[%s2 + $0x110] sm:$0xf]
  %v1573 = vld [vmem:[%s2 + $0x114] sm:$0xf]
  %v1574 = vld [vmem:[%s2 + $0x118] sm:$0xf]
  %v1575 = vld [vmem:[%s2 + $0x11c] sm:$0xf]
  %v1576 = vld [vmem:[%s2 + $0x120] sm:$0xf]
  %v1577 = vld [vmem:[%s2 + $0x124] sm:$0xf]
  %v1578 = vld [vmem:[%s2 + $0x128] sm:$0xf]
  %v1579 = vld [vmem:[%s2 + $0x12c] sm:$0xf]
  %v1580 = vld [vmem:[%s2 + $0x130] sm:$0xf]
  %v1581 = vld [vmem:[%s2 + $0x134] sm:$0xf]
  %v1582 = vld [vmem:[%s2 + $0x138] sm:$0xf]
  %v1583 = vld [vmem:[%s2 + $0x13c] sm:$0xf]
  %v1584 = vld [vmem:[%s2 + $0x140] sm:$0xf]
  %v1585 = vld [vmem:[%s2 + $0x144] sm:$0xf]
  %v1586 = vld [vmem:[%s2 + $0x148] sm:$0xf]
  %v1587 = vld [vmem:[%s2 + $0x14c] sm:$0xf]
  %v1588 = vld [vmem:[%s2 + $0x150] sm:$0xf]
  %v1589 = vld [vmem:[%s2 + $0x154] sm:$0xf]
  %v1590 = vld [vmem:[%s2 + $0x158] sm:$0xf]
  %v1591 = vld [vmem:[%s2 + $0x15c] sm:$0xf]
  %v1592 = vld [vmem:[%s2 + $0x160] sm:$0xf]
  %v1593 = vld [vmem:[%s2 + $0x164] sm:$0xf]
  %v1594 = vld [vmem:[%s2 + $0x168] sm:$0xf]
  %v1595 = vld [vmem:[%s2 + $0x16c] sm:$0xf]
  %v1596 = vld [vmem:[%s2 + $0x170] sm:$0xf]
  %v1597 = vld [vmem:[%s2 + $0x174] sm:$0xf]
  %v1598 = vld [vmem:[%s2 + $0x178] sm:$0xf]
  %v1599 = vld [vmem:[%s2 + $0x17c] sm:$0xf]
  %v1600 = vld [vmem:[%s2 + $0x180] sm:$0xf]
  %v1601 = vld [vmem:[%s2 + $0x184] sm:$0xf]
  %v1602 = vld [vmem:[%s2 + $0x188] sm:$0xf]
  %v1603 = vld [vmem:[%s2 + $0x18c] sm:$0xf]
  %v1604 = vld [vmem:[%s2 + $0x190] sm:$0xf]
  %v1605 = vld [vmem:[%s2 + $0x194] sm:$0xf]
  %v1606 = vld [vmem:[%s2 + $0x198] sm:$0xf]
  %v1607 = vld [vmem:[%s2 + $0x19c] sm:$0xf]
  %v1608 = vld [vmem:[%s2 + $0x1a0] sm:$0xf]
  %v1609 = vld [vmem:[%s2 + $0x1a4] sm:$0xf]
  %v1610 = vld [vmem:[%s2 + $0x1a8] sm:$0xf]
  %v1611 = vld [vmem:[%s2 + $0x1ac] sm:$0xf]
  %v1612 = vld [vmem:[%s2 + $0x1b0] sm:$0xf]
  %v1613 = vld [vmem:[%s2 + $0x1b4] sm:$0xf]
  %v1614 = vld [vmem:[%s2 + $0x1b8] sm:$0xf]
  %v1615 = vld [vmem:[%s2 + $0x1bc] sm:$0xf]
  %v1616 = vld [vmem:[%s2 + $0x1c0] sm:$0xf]
  %v1617 = vld [vmem:[%s2 + $0x1c4] sm:$0xf]
  %v1618 = vld [vmem:[%s2 + $0x1c8] sm:$0xf]
  %v1619 = vld [vmem:[%s2 + $0x1cc] sm:$0xf]
  %v1620 = vld [vmem:[%s2 + $0x1d0] sm:$0xf]
  %v1621 = vld [vmem:[%s2 + $0x1d4] sm:$0xf]
  %v1622 = vld [vmem:[%s2 + $0x1d8] sm:$0xf]
  %v1623 = vld [vmem:[%s2 + $0x1dc] sm:$0xf]
  %v1624 = vld [vmem:[%s2 + $0x1e0] sm:$0xf]
  %v1625 = vld [vmem:[%s2 + $0x1e4] sm:$0xf]
  %v1626 = vld [vmem:[%s2 + $0x1e8] sm:$0xf]
  %v1627 = vld [vmem:[%s2 + $0x1ec] sm:$0xf]
  %v1628 = vld [vmem:[%s2 + $0x1f0] sm:$0xf]
  %v1629 = vld [vmem:[%s2 + $0x1f4] sm:$0xf]
  %v1630 = vld [vmem:[%s2 + $0x1f8] sm:$0xf]
  %v1631 = vld [vmem:[%s2 + $0x1fc] sm:$0xf]
  %v1632 = vld [vmem:[%s2 + $0x200] sm:$0xf]
  %v1633 = vld [vmem:[%s2 + $0x204] sm:$0xf]
  %v1634 = vld [vmem:[%s2 + $0x208] sm:$0xf]
  %v1635 = vld [vmem:[%s2 + $0x20c] sm:$0xf]
  %v1636 = vld [vmem:[%s2 + $0x210] sm:$0xf]
  %v1637 = vld [vmem:[%s2 + $0x214] sm:$0xf]
  %v1638 = vld [vmem:[%s2 + $0x218] sm:$0xf]
  %v1639 = vld [vmem:[%s2 + $0x21c] sm:$0xf]
  %v1640 = vld [vmem:[%s2 + $0x220] sm:$0xf]
  %v1641 = vld [vmem:[%s2 + $0x224] sm:$0xf]
  %v1642 = vld [vmem:[%s2 + $0x228] sm:$0xf]
  %v1643 = vld [vmem:[%s2 + $0x22c] sm:$0xf]
  %v1644 = vld [vmem:[%s2 + $0x230] sm:$0xf]
  %v1645 = vld [vmem:[%s2 + $0x234] sm:$0xf]
  %v1646 = vld [vmem:[%s2 + $0x238] sm:$0xf]
  %v1647 = vld [vmem:[%s2 + $0x23c] sm:$0xf]
  %v1648 = vld [vmem:[%s2 + $0x240] sm:$0xf]
  %v1649 = vld [vmem:[%s2 + $0x244] sm:$0xf]
  %v1650 = vld [vmem:[%s2 + $0x248] sm:$0xf]
  %v1651 = vld [vmem:[%s2 + $0x24c] sm:$0xf]
  %v1652 = vld [vmem:[%s2 + $0x250] sm:$0xf]
  %v1653 = vld [vmem:[%s2 + $0x254] sm:$0xf]
  %v1654 = vld [vmem:[%s2 + $0x258] sm:$0xf]
  %v1655 = vld [vmem:[%s2 + $0x25c] sm:$0xf]
  %v1656 = vld [vmem:[%s2 + $0x260] sm:$0xf]
  %v1657 = vld [vmem:[%s2 + $0x264] sm:$0xf]
  %v1658 = vld [vmem:[%s2 + $0x268] sm:$0xf]
  %v1659 = vld [vmem:[%s2 + $0x26c] sm:$0xf]
  %v1660 = vld [vmem:[%s2 + $0x270] sm:$0xf]
  %v1661 = vld [vmem:[%s2 + $0x274] sm:$0xf]
  %v1662 = vld [vmem:[%s2 + $0x278] sm:$0xf]
  %v1663 = vld [vmem:[%s2 + $0x27c] sm:$0xf]
  %v1664 = vld [vmem:[%s2 + $0x280] sm:$0xf]
  %v1665 = vld [vmem:[%s2 + $0x284] sm:$0xf]
  %v1666 = vld [vmem:[%s2 + $0x288] sm:$0xf]
  %v1667 = vld [vmem:[%s2 + $0x28c] sm:$0xf]
  %v1668 = vld [vmem:[%s2 + $0x290] sm:$0xf]
  %v1669 = vld [vmem:[%s2 + $0x294] sm:$0xf]
  %v1670 = vld [vmem:[%s2 + $0x298] sm:$0xf]
  %v1671 = vld [vmem:[%s2 + $0x29c] sm:$0xf]
  %v1672 = vld [vmem:[%s2 + $0x2a0] sm:$0xf]
  %v1673 = vld [vmem:[%s2 + $0x2a4] sm:$0xf]
  %v1674 = vld [vmem:[%s2 + $0x2a8] sm:$0xf]
  %v1675 = vld [vmem:[%s2 + $0x2ac] sm:$0xf]
  %v1676 = vld [vmem:[%s2 + $0x2b0] sm:$0xf]
  %v1677 = vld [vmem:[%s2 + $0x2b4] sm:$0xf]
  %v1678 = vld [vmem:[%s2 + $0x2b8] sm:$0xf]
  %v1679 = vld [vmem:[%s2 + $0x2bc] sm:$0xf]
  %v1680 = vld [vmem:[%s2 + $0x2c0] sm:$0xf]
  %v1681 = vld [vmem:[%s2 + $0x2c4] sm:$0xf]
  %v1682 = vld [vmem:[%s2 + $0x2c8] sm:$0xf]
  %v1683 = vld [vmem:[%s2 + $0x2cc] sm:$0xf]
  %v1684 = vld [vmem:[%s2 + $0x2d0] sm:$0xf]
  %v1685 = vld [vmem:[%s2 + $0x2d4] sm:$0xf]
  %v1686 = vld [vmem:[%s2 + $0x2d8] sm:$0xf]
  %v1687 = vld [vmem:[%s2 + $0x2dc] sm:$0xf]
  %v1688 = vld [vmem:[%s2 + $0x2e0] sm:$0xf]
  %v1689 = vld [vmem:[%s2 + $0x2e4] sm:$0xf]
  %v1690 = vld [vmem:[%s2 + $0x2e8] sm:$0xf]
  %v1691 = vld [vmem:[%s2 + $0x2ec] sm:$0xf]
  %v1692 = vld [vmem:[%s2 + $0x2f0] sm:$0xf]
  %v1693 = vld [vmem:[%s2 + $0x2f4] sm:$0xf]
  %v1694 = vld [vmem:[%s2 + $0x2f8] sm:$0xf]
  %v1695 = vld [vmem:[%s2 + $0x2fc] sm:$0xf]
  %v1888 = vunpack.c.l.b16 %v1504
  %v1889 = vunpack.c.l.b16 %v1505
  %v1890 = vunpack.c.l.b16 %v1506
  %v1891 = vunpack.c.l.b16 %v1507
  %v1892 = vunpack.c.l.b16 %v1508
  %v1893 = vunpack.c.l.b16 %v1509
  %v1894 = vunpack.c.l.b16 %v1510
  %v1895 = vunpack.c.l.b16 %v1511
  %v1896 = vunpack.c.l.b16 %v1512
  %v1897 = vunpack.c.l.b16 %v1513
  %v1898 = vunpack.c.l.b16 %v1514
  %v1899 = vunpack.c.l.b16 %v1515
  %v1900 = vunpack.c.l.b16 %v1516
  %v1901 = vunpack.c.l.b16 %v1517
  %v1902 = vunpack.c.l.b16 %v1518
  %v1903 = vunpack.c.l.b16 %v1519
  %v1904 = vunpack.c.l.b16 %v1520
  %v1905 = vunpack.c.l.b16 %v1521
  %v1906 = vunpack.c.l.b16 %v1522
  %v1907 = vunpack.c.l.b16 %v1523
  %v1908 = vunpack.c.l.b16 %v1524
  %v1909 = vunpack.c.l.b16 %v1525
  %v1910 = vunpack.c.l.b16 %v1526
  %v1911 = vunpack.c.l.b16 %v1527
  %v1912 = vunpack.c.l.b16 %v1528
  %v1913 = vunpack.c.l.b16 %v1529
  %v1914 = vunpack.c.l.b16 %v1530
  %v1915 = vunpack.c.l.b16 %v1531
  %v1916 = vunpack.c.l.b16 %v1532
  %v1917 = vunpack.c.l.b16 %v1533
  %v1918 = vunpack.c.l.b16 %v1534
  %v1919 = vunpack.c.l.b16 %v1535
  %v1920 = vunpack.c.l.b16 %v1536
  %v1921 = vunpack.c.l.b16 %v1537
  %v1922 = vunpack.c.l.b16 %v1538
  %v1923 = vunpack.c.l.b16 %v1539
  %v1924 = vunpack.c.l.b16 %v1540
  %v1925 = vunpack.c.l.b16 %v1541
  %v1926 = vunpack.c.l.b16 %v1542
  %v1927 = vunpack.c.l.b16 %v1543
  %v1928 = vunpack.c.l.b16 %v1544
  %v1929 = vunpack.c.l.b16 %v1545
  %v1930 = vunpack.c.l.b16 %v1546
  %v1931 = vunpack.c.l.b16 %v1547
  %v1932 = vunpack.c.l.b16 %v1548
  %v1933 = vunpack.c.l.b16 %v1549
  %v1934 = vunpack.c.l.b16 %v1550
  %v1935 = vunpack.c.l.b16 %v1551
  %v1936 = vunpack.c.l.b16 %v1552
  %v1937 = vunpack.c.l.b16 %v1553
  %v1938 = vunpack.c.l.b16 %v1554
  %v1939 = vunpack.c.l.b16 %v1555
  %v1940 = vunpack.c.l.b16 %v1556
  %v1941 = vunpack.c.l.b16 %v1557
  %v1942 = vunpack.c.l.b16 %v1558
  %v1943 = vunpack.c.l.b16 %v1559
  %v1944 = vunpack.c.l.b16 %v1560
  %v1945 = vunpack.c.l.b16 %v1561
  %v1946 = vunpack.c.l.b16 %v1562
  %v1947 = vunpack.c.l.b16 %v1563
  %v1948 = vunpack.c.l.b16 %v1564
  %v1949 = vunpack.c.l.b16 %v1565
  %v1950 = vunpack.c.l.b16 %v1566
  %v1951 = vunpack.c.l.b16 %v1567
  %v1952 = vunpack.c.l.b16 %v1568
  %v1953 = vunpack.c.l.b16 %v1569
  %v1954 = vunpack.c.l.b16 %v1570
  %v1955 = vunpack.c.l.b16 %v1571
  %v1956 = vunpack.c.l.b16 %v1572
  %v1957 = vunpack.c.l.b16 %v1573
  %v1958 = vunpack.c.l.b16 %v1574
  %v1959 = vunpack.c.l.b16 %v1575
  %v1960 = vunpack.c.l.b16 %v1576
  %v1961 = vunpack.c.l.b16 %v1577
  %v1962 = vunpack.c.l.b16 %v1578
  %v1963 = vunpack.c.l.b16 %v1579
  %v1964 = vunpack.c.l.b16 %v1580
  %v1965 = vunpack.c.l.b16 %v1581
  %v1966 = vunpack.c.l.b16 %v1582
  %v1967 = vunpack.c.l.b16 %v1583
  %v1968 = vunpack.c.l.b16 %v1584
  %v1969 = vunpack.c.l.b16 %v1585
  %v1970 = vunpack.c.l.b16 %v1586
  %v1971 = vunpack.c.l.b16 %v1587
  %v1972 = vunpack.c.l.b16 %v1588
  %v1973 = vunpack.c.l.b16 %v1589
  %v1974 = vunpack.c.l.b16 %v1590
  %v1975 = vunpack.c.l.b16 %v1591
  %v1976 = vunpack.c.l.b16 %v1592
  %v1977 = vunpack.c.l.b16 %v1593
  %v1978 = vunpack.c.l.b16 %v1594
  %v1979 = vunpack.c.l.b16 %v1595
  %v1980 = vunpack.c.l.b16 %v1596
  %v1981 = vunpack.c.l.b16 %v1597
  %v1982 = vunpack.c.l.b16 %v1598
  %v1983 = vunpack.c.l.b16 %v1599
  %v1984 = vunpack.c.l.b16 %v1600
  %v1985 = vunpack.c.l.b16 %v1601
  %v1986 = vunpack.c.l.b16 %v1602
  %v1987 = vunpack.c.l.b16 %v1603
  %v1988 = vunpack.c.l.b16 %v1604
  %v1989 = vunpack.c.l.b16 %v1605
  %v1990 = vunpack.c.l.b16 %v1606
  %v1991 = vunpack.c.l.b16 %v1607
  %v1992 = vunpack.c.l.b16 %v1608
  %v1993 = vunpack.c.l.b16 %v1609
  %v1994 = vunpack.c.l.b16 %v1610
  %v1995 = vunpack.c.l.b16 %v1611
  %v1996 = vunpack.c.l.b16 %v1612
  %v1997 = vunpack.c.l.b16 %v1613
  %v1998 = vunpack.c.l.b16 %v1614
  %v1999 = vunpack.c.l.b16 %v1615
  %v2000 = vunpack.c.l.b16 %v1616
  %v2001 = vunpack.c.l.b16 %v1617
  %v2002 = vunpack.c.l.b16 %v1618
  %v2003 = vunpack.c.l.b16 %v1619
  %v2004 = vunpack.c.l.b16 %v1620
  %v2005 = vunpack.c.l.b16 %v1621
  %v2006 = vunpack.c.l.b16 %v1622
  %v2007 = vunpack.c.l.b16 %v1623
  %v2008 = vunpack.c.l.b16 %v1624
  %v2009 = vunpack.c.l.b16 %v1625
  %v2010 = vunpack.c.l.b16 %v1626
  %v2011 = vunpack.c.l.b16 %v1627
  %v2012 = vunpack.c.l.b16 %v1628
  %v2013 = vunpack.c.l.b16 %v1629
  %v2014 = vunpack.c.l.b16 %v1630
  %v2015 = vunpack.c.l.b16 %v1631
  %v2016 = vunpack.c.l.b16 %v1632
  %v2017 = vunpack.c.l.b16 %v1633
  %v2018 = vunpack.c.l.b16 %v1634
  %v2019 = vunpack.c.l.b16 %v1635
  %v2020 = vunpack.c.l.b16 %v1636
  %v2021 = vunpack.c.l.b16 %v1637
  %v2022 = vunpack.c.l.b16 %v1638
  %v2023 = vunpack.c.l.b16 %v1639
  %v2024 = vunpack.c.l.b16 %v1640
  %v2025 = vunpack.c.l.b16 %v1641
  %v2026 = vunpack.c.l.b16 %v1642
  %v2027 = vunpack.c.l.b16 %v1643
  %v2028 = vunpack.c.l.b16 %v1644
  %v2029 = vunpack.c.l.b16 %v1645
  %v2030 = vunpack.c.l.b16 %v1646
  %v2031 = vunpack.c.l.b16 %v1647
  %v2032 = vunpack.c.l.b16 %v1648
  %v2033 = vunpack.c.l.b16 %v1649
  %v2034 = vunpack.c.l.b16 %v1650
  %v2035 = vunpack.c.l.b16 %v1651
  %v2036 = vunpack.c.l.b16 %v1652
  %v2037 = vunpack.c.l.b16 %v1653
  %v2038 = vunpack.c.l.b16 %v1654
  %v2039 = vunpack.c.l.b16 %v1655
  %v2040 = vunpack.c.l.b16 %v1656
  %v2041 = vunpack.c.l.b16 %v1657
  %v2042 = vunpack.c.l.b16 %v1658
  %v2043 = vunpack.c.l.b16 %v1659
  %v2044 = vunpack.c.l.b16 %v1660
  %v2045 = vunpack.c.l.b16 %v1661
  %v2046 = vunpack.c.l.b16 %v1662
  %v2047 = vunpack.c.l.b16 %v1663
  %v2048 = vunpack.c.l.b16 %v1664
  %v2049 = vunpack.c.l.b16 %v1665
  %v2050 = vunpack.c.l.b16 %v1666
  %v2051 = vunpack.c.l.b16 %v1667
  %v2052 = vunpack.c.l.b16 %v1668
  %v2053 = vunpack.c.l.b16 %v1669
  %v2054 = vunpack.c.l.b16 %v1670
  %v2055 = vunpack.c.l.b16 %v1671
  %v2056 = vunpack.c.l.b16 %v1672
  %v2057 = vunpack.c.l.b16 %v1673
  %v2058 = vunpack.c.l.b16 %v1674
  %v2059 = vunpack.c.l.b16 %v1675
  %v2060 = vunpack.c.l.b16 %v1676
  %v2061 = vunpack.c.l.b16 %v1677
  %v2062 = vunpack.c.l.b16 %v1678
  %v2063 = vunpack.c.l.b16 %v1679
  %v2064 = vunpack.c.l.b16 %v1680
  %v2065 = vunpack.c.l.b16 %v1681
  %v2066 = vunpack.c.l.b16 %v1682
  %v2067 = vunpack.c.l.b16 %v1683
  %v2068 = vunpack.c.l.b16 %v1684
  %v2069 = vunpack.c.l.b16 %v1685
  %v2070 = vunpack.c.l.b16 %v1686
  %v2071 = vunpack.c.l.b16 %v1687
  %v2072 = vunpack.c.l.b16 %v1688
  %v2073 = vunpack.c.l.b16 %v1689
  %v2074 = vunpack.c.l.b16 %v1690
  %v2075 = vunpack.c.l.b16 %v1691
  %v2076 = vunpack.c.l.b16 %v1692
  %v2077 = vunpack.c.l.b16 %v1693
  %v2078 = vunpack.c.l.b16 %v1694
  %v2079 = vunpack.c.l.b16 %v1695
  %v2080 = vpack.c.b16 %v1889, %v1888
  %v2081 = vpack.c.b16 %v1891, %v1890
  %v2082 = vpack.c.b16 %v1893, %v1892
  %v2083 = vpack.c.b16 %v1895, %v1894
  %v2084 = vpack.c.b16 %v1897, %v1896
  %v2085 = vpack.c.b16 %v1899, %v1898
  %v2086 = vpack.c.b16 %v1901, %v1900
  %v2087 = vpack.c.b16 %v1903, %v1902
  %v2088 = vpack.c.b16 %v1905, %v1904
  %v2089 = vpack.c.b16 %v1907, %v1906
  %v2090 = vpack.c.b16 %v1909, %v1908
  %v2091 = vpack.c.b16 %v1911, %v1910
  %v2092 = vpack.c.b16 %v1913, %v1912
  %v2093 = vpack.c.b16 %v1915, %v1914
  %v2094 = vpack.c.b16 %v1917, %v1916
  %v2095 = vpack.c.b16 %v1919, %v1918
  %v2096 = vpack.c.b16 %v1921, %v1920
  %v2097 = vpack.c.b16 %v1923, %v1922
  %v2098 = vpack.c.b16 %v1925, %v1924
  %v2099 = vpack.c.b16 %v1927, %v1926
  %v2100 = vpack.c.b16 %v1929, %v1928
  %v2101 = vpack.c.b16 %v1931, %v1930
  %v2102 = vpack.c.b16 %v1933, %v1932
  %v2103 = vpack.c.b16 %v1935, %v1934
  %v2104 = vpack.c.b16 %v1937, %v1936
  %v2105 = vpack.c.b16 %v1939, %v1938
  %v2106 = vpack.c.b16 %v1941, %v1940
  %v2107 = vpack.c.b16 %v1943, %v1942
  %v2108 = vpack.c.b16 %v1945, %v1944
  %v2109 = vpack.c.b16 %v1947, %v1946
  %v2110 = vpack.c.b16 %v1949, %v1948
  %v2111 = vpack.c.b16 %v1951, %v1950
  %v2112 = vpack.c.b16 %v1953, %v1952
  %v2113 = vpack.c.b16 %v1955, %v1954
  %v2114 = vpack.c.b16 %v1957, %v1956
  %v2115 = vpack.c.b16 %v1959, %v1958
  %v2116 = vpack.c.b16 %v1961, %v1960
  %v2117 = vpack.c.b16 %v1963, %v1962
  %v2118 = vpack.c.b16 %v1965, %v1964
  %v2119 = vpack.c.b16 %v1967, %v1966
  %v2120 = vpack.c.b16 %v1969, %v1968
  %v2121 = vpack.c.b16 %v1971, %v1970
  %v2122 = vpack.c.b16 %v1973, %v1972
  %v2123 = vpack.c.b16 %v1975, %v1974
  %v2124 = vpack.c.b16 %v1977, %v1976
  %v2125 = vpack.c.b16 %v1979, %v1978
  %v2126 = vpack.c.b16 %v1981, %v1980
  %v2127 = vpack.c.b16 %v1983, %v1982
  %v2128 = vpack.c.b16 %v1985, %v1984
  %v2129 = vpack.c.b16 %v1987, %v1986
  %v2130 = vpack.c.b16 %v1989, %v1988
  %v2131 = vpack.c.b16 %v1991, %v1990
  %v2132 = vpack.c.b16 %v1993, %v1992
  %v2133 = vpack.c.b16 %v1995, %v1994
  %v2134 = vpack.c.b16 %v1997, %v1996
  %v2135 = vpack.c.b16 %v1999, %v1998
  %v2136 = vpack.c.b16 %v2001, %v2000
  %v2137 = vpack.c.b16 %v2003, %v2002
  %v2138 = vpack.c.b16 %v2005, %v2004
  %v2139 = vpack.c.b16 %v2007, %v2006
  %v2140 = vpack.c.b16 %v2009, %v2008
  %v2141 = vpack.c.b16 %v2011, %v2010
  %v2142 = vpack.c.b16 %v2013, %v2012
  %v2143 = vpack.c.b16 %v2015, %v2014
  %v2144 = vpack.c.b16 %v2017, %v2016
  %v2145 = vpack.c.b16 %v2019, %v2018
  %v2146 = vpack.c.b16 %v2021, %v2020
  %v2147 = vpack.c.b16 %v2023, %v2022
  %v2148 = vpack.c.b16 %v2025, %v2024
  %v2149 = vpack.c.b16 %v2027, %v2026
  %v2150 = vpack.c.b16 %v2029, %v2028
  %v2151 = vpack.c.b16 %v2031, %v2030
  %v2152 = vpack.c.b16 %v2033, %v2032
  %v2153 = vpack.c.b16 %v2035, %v2034
  %v2154 = vpack.c.b16 %v2037, %v2036
  %v2155 = vpack.c.b16 %v2039, %v2038
  %v2156 = vpack.c.b16 %v2041, %v2040
  %v2157 = vpack.c.b16 %v2043, %v2042
  %v2158 = vpack.c.b16 %v2045, %v2044
  %v2159 = vpack.c.b16 %v2047, %v2046
  %v2160 = vpack.c.b16 %v2049, %v2048
  %v2161 = vpack.c.b16 %v2051, %v2050
  %v2162 = vpack.c.b16 %v2053, %v2052
  %v2163 = vpack.c.b16 %v2055, %v2054
  %v2164 = vpack.c.b16 %v2057, %v2056
  %v2165 = vpack.c.b16 %v2059, %v2058
  %v2166 = vpack.c.b16 %v2061, %v2060
  %v2167 = vpack.c.b16 %v2063, %v2062
  %v2168 = vpack.c.b16 %v2065, %v2064
  %v2169 = vpack.c.b16 %v2067, %v2066
  %v2170 = vpack.c.b16 %v2069, %v2068
  %v2171 = vpack.c.b16 %v2071, %v2070
  %v2172 = vpack.c.b16 %v2073, %v2072
  %v2173 = vpack.c.b16 %v2075, %v2074
  %v2174 = vpack.c.b16 %v2077, %v2076
  %v2175 = vpack.c.b16 %v2079, %v2078
  %2272 = vmatprep.subr.bf16.mxu0 0
  %2273 = vmatpush1.bf16.msra.mxu0 %v2080
  %2274 = vmatprep.subr.bf16.mxu0 0
  %2275 = vmatpush1.bf16.msra.mxu0 %v2081
  %2276 = vmatprep.subr.bf16.mxu0 0
  %2277 = vmatpush1.bf16.msra.mxu0 %v2082
  %2278 = vmatprep.subr.bf16.mxu0 0
  %2279 = vmatpush1.bf16.msra.mxu0 %v2083
  %2280 = vmatprep.subr.bf16.mxu0 0
  %2281 = vmatpush1.bf16.msra.mxu0 %v2084
  %2282 = vmatprep.subr.bf16.mxu0 0
  %2283 = vmatpush1.bf16.msra.mxu0 %v2085
  %2284 = vmatprep.subr.bf16.mxu0 0
  %2285 = vmatpush1.bf16.msra.mxu0 %v2086
  %2286 = vmatprep.subr.bf16.mxu0 0
  %2287 = vmatpush1.bf16.msra.mxu0 %v2087
  %2288 = vmatprep.subr.bf16.mxu0 0
  %2289 = vmatpush1.bf16.msra.mxu0 %v2088
  %2290 = vmatprep.subr.bf16.mxu0 0
  %2291 = vmatpush1.bf16.msra.mxu0 %v2089
  %2292 = vmatprep.subr.bf16.mxu0 0
  %2293 = vmatpush1.bf16.msra.mxu0 %v2090
  %2294 = vmatprep.subr.bf16.mxu0 0
  %2295 = vmatpush1.bf16.msra.mxu0 %v2091
  %2296 = vmatprep.subr.bf16.mxu0 0
  %2297 = vmatpush1.bf16.msra.mxu0 %v2092
  %2298 = vmatprep.subr.bf16.mxu0 0
  %2299 = vmatpush1.bf16.msra.mxu0 %v2093
  %2300 = vmatprep.subr.bf16.mxu0 0
  %2301 = vmatpush1.bf16.msra.mxu0 %v2094
  %2302 = vmatprep.subr.bf16.mxu0 0
  %2303 = vmatpush1.bf16.msra.mxu0 %v2095
  %2304 = vmatprep.mubr.bf16.mxu0 %v402
  %2305 = vmatmul.mubr.bf16.gmra.mrb[0].mxu0 %v401
  %v2306 = vpop.f32.mrb[0].mxu0
  %v2307 = vadd.f32 0.0, %v2306
  %v2308 = vpop.f32.mrb[0].mxu0
  %v2309 = vpop.f32.mrb[0].mxu0
  %v2310 = vadd.f32 0.0, %v2309
  %v2311 = vpop.f32.mrb[0].mxu0
  %2312 = vmatprep.mubr.bf16.mxu0 %v414
  %2313 = vmatmul.mubr.bf16.gmra.mrb[0].mxu0 %v413
  %v2314 = vpop.f32.mrb[0].mxu0
  %v2315 = vadd.f32 0.0, %v2314
  %v2316 = vpop.f32.mrb[0].mxu0
  %v2317 = vpop.f32.mrb[0].mxu0
  %v2318 = vadd.f32 0.0, %v2317
  %v2319 = vpop.f32.mrb[0].mxu0
  %2320 = vmatprep.mubr.bf16.mxu0 %v426
  %2321 = vmatmul.mubr.bf16.gmra.mrb[0].mxu0 %v425
  %v2322 = vpop.f32.mrb[0].mxu0
  %v2323 = vadd.f32 0.0, %v2322
  %v2324 = vpop.f32.mrb[0].mxu0
  %v2325 = vpop.f32.mrb[0].mxu0
  %v2326 = vadd.f32 0.0, %v2325
  %v2327 = vpop.f32.mrb[0].mxu0
  %2328 = vmatprep.mubr.bf16.mxu0 %v438
  %2329 = vmatmul.mubr.bf16.gmra.mrb[0].mxu0 %v437
  %v2330 = vpop.f32.mrb[0].mxu0
  %v2331 = vadd.f32 0.0, %v2330
  %v2332 = vpop.f32.mrb[0].mxu0
  %v2333 = vpop.f32.mrb[0].mxu0
  %v2334 = vadd.f32 0.0, %v2333
  %v2335 = vpop.f32.mrb[0].mxu0
  %2336 = vdwg.mxu0
  %2337 = vmatprep.subr.bf16.mxu0 0
  %2338 = vmatpush1.bf16.msra.mxu0 %v2096
  %2339 = vmatprep.subr.bf16.mxu0 0
  %2340 = vmatpush1.bf16.msra.mxu0 %v2097
  %2341 = vmatprep.subr.bf16.mxu0 0
  %2342 = vmatpush1.bf16.msra.mxu0 %v2098
  %2343 = vmatprep.subr.bf16.mxu0 0
  %2344 = vmatpush1.bf16.msra.mxu0 %v2099
  %2345 = vmatprep.subr.bf16.mxu0 0
  %2346 = vmatpush1.bf16.msra.mxu0 %v2100
  %2347 = vmatprep.subr.bf16.mxu0 0
  %2348 = vmatpush1.bf16.msra.mxu0 %v2101
  %2349 = vmatprep.subr.bf16.mxu0 0
  %2350 = vmatpush1.bf16.msra.mxu0 %v2102
  %2351 = vmatprep.subr.bf16.mxu0 0
  %2352 = vmatpush1.bf16.msra.mxu0 %v2103
  %2353 = vmatprep.subr.bf16.mxu0 0
  %2354 = vmatpush1.bf16.msra.mxu0 %v2104
  %2355 = vmatprep.subr.bf16.mxu0 0
  %2356 = vmatpush1.bf16.msra.mxu0 %v2105
  %2357 = vmatprep.subr.bf16.mxu0 0
  %2358 = vmatpush1.bf16.msra.mxu0 %v2106
  %2359 = vmatprep.subr.bf16.mxu0 0
  %2360 = vmatpush1.bf16.msra.mxu0 %v2107
  %2361 = vmatprep.subr.bf16.mxu0 0
  %2362 = vmatpush1.bf16.msra.mxu0 %v2108
  %2363 = vmatprep.subr.bf16.mxu0 0
  %2364 = vmatpush1.bf16.msra.mxu0 %v2109
  %2365 = vmatprep.subr.bf16.mxu0 0
  %2366 = vmatpush1.bf16.msra.mxu0 %v2110
  %2367 = vmatprep.subr.bf16.mxu0 0
  %2368 = vmatpush1.bf16.msra.mxu0 %v2111
  %2369 = vmatprep.mubr.bf16.mxu0 %v404
  %2370 = vmatmul.mubr.bf16.gmra.mrb[0].mxu0 %v403
  %v2371 = vpop.f32.mrb[0].mxu0
  %v2372 = vadd.f32 %v2307, %v2371
  %v2373 = vpop.f32.mrb[0].mxu0
  %v2374 = vpop.f32.mrb[0].mxu0
  %v2375 = vadd.f32 %v2310, %v2374
  %v2376 = vpop.f32.mrb[0].mxu0
  %2377 = vmatprep.mubr.bf16.mxu0 %v416
  %2378 = vmatmul.mubr.bf16.gmra.mrb[0].mxu0 %v415
  %v2379 = vpop.f32.mrb[0].mxu0
  %v2380 = vadd.f32 %v2315, %v2379
  %v2381 = vpop.f32.mrb[0].mxu0
  %v2382 = vpop.f32.mrb[0].mxu0
  %v2383 = vadd.f32 %v2318, %v2382
  %v2384 = vpop.f32.mrb[0].mxu0
  %2385 = vmatprep.mubr.bf16.mxu0 %v428
  %2386 = vmatmul.mubr.bf16.gmra.mrb[0].mxu0 %v427
  %v2387 = vpop.f32.mrb[0].mxu0
  %v2388 = vadd.f32 %v2323, %v2387
  %v2389 = vpop.f32.mrb[0].mxu0
  %v2390 = vpop.f32.mrb[0].mxu0
  %v2391 = vadd.f32 %v2326, %v2390
  %v2392 = vpop.f32.mrb[0].mxu0
  %2393 = vmatprep.mubr.bf16.mxu0 %v440
  %2394 = vmatmul.mubr.bf16.gmra.mrb[0].mxu0 %v439
  %v2395 = vpop.f32.mrb[0].mxu0
  %v2396 = vadd.f32 %v2331, %v2395
  %v2397 = vpop.f32.mrb[0].mxu0
  %v2398 = vpop.f32.mrb[0].mxu0
  %v2399 = vadd.f32 %v2334, %v2398
  %v2400 = vpop.f32.mrb[0].mxu0
  %2401 = vdwg.mxu0
  %2402 = vmatprep.subr.bf16.mxu0 0
  %2403 = vmatpush1.bf16.msra.mxu0 %v2112
  %2404 = vmatprep.subr.bf16.mxu0 0
  %2405 = vmatpush1.bf16.msra.mxu0 %v2113
  %2406 = vmatprep.subr.bf16.mxu0 0
  %2407 = vmatpush1.bf16.msra.mxu0 %v2114
  %2408 = vmatprep.subr.bf16.mxu0 0
  %2409 = vmatpush1.bf16.msra.mxu0 %v2115
  %2410 = vmatprep.subr.bf16.mxu0 0
  %2411 = vmatpush1.bf16.msra.mxu0 %v2116
  %2412 = vmatprep.subr.bf16.mxu0 0
  %2413 = vmatpush1.bf16.msra.mxu0 %v2117
  %2414 = vmatprep.subr.bf16.mxu0 0
  %2415 = vmatpush1.bf16.msra.mxu0 %v2118
  %2416 = vmatprep.subr.bf16.mxu0 0
  %2417 = vmatpush1.bf16.msra.mxu0 %v2119
  %2418 = vmatprep.subr.bf16.mxu0 0
  %2419 = vmatpush1.bf16.msra.mxu0 %v2120
  %2420 = vmatprep.subr.bf16.mxu0 0
  %2421 = vmatpush1.bf16.msra.mxu0 %v2121
  %2422 = vmatprep.subr.bf16.mxu0 0
  %2423 = vmatpush1.bf16.msra.mxu0 %v2122
  %2424 = vmatprep.subr.bf16.mxu0 0
  %2425 = vmatpush1.bf16.msra.mxu0 %v2123
  %2426 = vmatprep.subr.bf16.mxu0 0
  %2427 = vmatpush1.bf16.msra.mxu0 %v2124
  %2428 = vmatprep.subr.bf16.mxu0 0
  %2429 = vmatpush1.bf16.msra.mxu0 %v2125
  %2430 = vmatprep.subr.bf16.mxu0 0
  %2431 = vmatpush1.bf16.msra.mxu0 %v2126
  %2432 = vmatprep.subr.bf16.mxu0 0
  %2433 = vmatpush1.bf16.msra.mxu0 %v2127
  %2434 = vmatprep.mubr.bf16.mxu0 %v406
  %2435 = vmatmul.mubr.bf16.gmra.mrb[0].mxu0 %v405
  %v2436 = vpop.f32.mrb[0].mxu0
  %v2437 = vadd.f32 %v2372, %v2436
  %v2438 = vpop.f32.mrb[0].mxu0
  %v2439 = vpop.f32.mrb[0].mxu0
  %v2440 = vadd.f32 %v2375, %v2439
  %v2441 = vpop.f32.mrb[0].mxu0
  %2442 = vmatprep.mubr.bf16.mxu0 %v418
  %2443 = vmatmul.mubr.bf16.gmra.mrb[0].mxu0 %v417
  %v2444 = vpop.f32.mrb[0].mxu0
  %v2445 = vadd.f32 %v2380, %v2444
  %v2446 = vpop.f32.mrb[0].mxu0
  %v2447 = vpop.f32.mrb[0].mxu0
  %v2448 = vadd.f32 %v2383, %v2447
  %v2449 = vpop.f32.mrb[0].mxu0
  %2450 = vmatprep.mubr.bf16.mxu0 %v430
  %2451 = vmatmul.mubr.bf16.gmra.mrb[0].mxu0 %v429
  %v2452 = vpop.f32.mrb[0].mxu0
  %v2453 = vadd.f32 %v2388, %v2452
  %v2454 = vpop.f32.mrb[0].mxu0
  %v2455 = vpop.f32.mrb[0].mxu0
  %v2456 = vadd.f32 %v2391, %v2455
  %v2457 = vpop.f32.mrb[0].mxu0
  %2458 = vmatprep.mubr.bf16.mxu0 %v442
  %2459 = vmatmul.mubr.bf16.gmra.mrb[0].mxu0 %v441
  %v2460 = vpop.f32.mrb[0].mxu0
  %v2461 = vadd.f32 %v2396, %v2460
  %v2462 = vpop.f32.mrb[0].mxu0
  %v2463 = vpop.f32.mrb[0].mxu0
  %v2464 = vadd.f32 %v2399, %v2463
  %v2465 = vpop.f32.mrb[0].mxu0
  %2466 = vdwg.mxu0
  %2467 = vmatprep.subr.bf16.mxu0 0
  %2468 = vmatpush1.bf16.msra.mxu0 %v2128
  %2469 = vmatprep.subr.bf16.mxu0 0
  %2470 = vmatpush1.bf16.msra.mxu0 %v2129
  %2471 = vmatprep.subr.bf16.mxu0 0
  %2472 = vmatpush1.bf16.msra.mxu0 %v2130
  %2473 = vmatprep.subr.bf16.mxu0 0
  %2474 = vmatpush1.bf16.msra.mxu0 %v2131
  %2475 = vmatprep.subr.bf16.mxu0 0
  %2476 = vmatpush1.bf16.msra.mxu0 %v2132
  %2477 = vmatprep.subr.bf16.mxu0 0
  %2478 = vmatpush1.bf16.msra.mxu0 %v2133
  %2479 = vmatprep.subr.bf16.mxu0 0
  %2480 = vmatpush1.bf16.msra.mxu0 %v2134
  %2481 = vmatprep.subr.bf16.mxu0 0
  %2482 = vmatpush1.bf16.msra.mxu0 %v2135
  %2483 = vmatprep.subr.bf16.mxu0 0
  %2484 = vmatpush1.bf16.msra.mxu0 %v2136
  %2485 = vmatprep.subr.bf16.mxu0 0
  %2486 = vmatpush1.bf16.msra.mxu0 %v2137
  %2487 = vmatprep.subr.bf16.mxu0 0
  %2488 = vmatpush1.bf16.msra.mxu0 %v2138
  %2489 = vmatprep.subr.bf16.mxu0 0
  %2490 = vmatpush1.bf16.msra.mxu0 %v2139
  %2491 = vmatprep.subr.bf16.mxu0 0
  %2492 = vmatpush1.bf16.msra.mxu0 %v2140
  %2493 = vmatprep.subr.bf16.mxu0 0
  %2494 = vmatpush1.bf16.msra.mxu0 %v2141
  %2495 = vmatprep.subr.bf16.mxu0 0
  %2496 = vmatpush1.bf16.msra.mxu0 %v2142
  %2497 = vmatprep.subr.bf16.mxu0 0
  %2498 = vmatpush1.bf16.msra.mxu0 %v2143
  %2499 = vmatprep.mubr.bf16.mxu0 %v408
  %2500 = vmatmul.mubr.bf16.gmra.mrb[0].mxu0 %v407
  %v2501 = vpop.f32.mrb[0].mxu0
  %v2502 = vadd.f32 %v2437, %v2501
  %v2503 = vpop.f32.mrb[0].mxu0
  %v2504 = vpop.f32.mrb[0].mxu0
  %v2505 = vadd.f32 %v2440, %v2504
  %v2506 = vpop.f32.mrb[0].mxu0
  %2507 = vmatprep.mubr.bf16.mxu0 %v420
  %2508 = vmatmul.mubr.bf16.gmra.mrb[0].mxu0 %v419
  %v2509 = vpop.f32.mrb[0].mxu0
  %v2510 = vadd.f32 %v2445, %v2509
  %v2511 = vpop.f32.mrb[0].mxu0
  %v2512 = vpop.f32.mrb[0].mxu0
  %v2513 = vadd.f32 %v2448, %v2512
  %v2514 = vpop.f32.mrb[0].mxu0
  %2515 = vmatprep.mubr.bf16.mxu0 %v432
  %2516 = vmatmul.mubr.bf16.gmra.mrb[0].mxu0 %v431
  %v2517 = vpop.f32.mrb[0].mxu0
  %v2518 = vadd.f32 %v2453, %v2517
  %v2519 = vpop.f32.mrb[0].mxu0
  %v2520 = vpop.f32.mrb[0].mxu0
  %v2521 = vadd.f32 %v2456, %v2520
  %v2522 = vpop.f32.mrb[0].mxu0
  %2523 = vmatprep.mubr.bf16.mxu0 %v444
  %2524 = vmatmul.mubr.bf16.gmra.mrb[0].mxu0 %v443
  %v2525 = vpop.f32.mrb[0].mxu0
  %v2526 = vadd.f32 %v2461, %v2525
  %v2527 = vpop.f32.mrb[0].mxu0
  %v2528 = vpop.f32.mrb[0].mxu0
  %v2529 = vadd.f32 %v2464, %v2528
  %v2530 = vpop.f32.mrb[0].mxu0
  %2531 = vdwg.mxu0
  %2532 = vmatprep.subr.bf16.mxu0 0
  %2533 = vmatpush1.bf16.msra.mxu0 %v2144
  %2534 = vmatprep.subr.bf16.mxu0 0
  %2535 = vmatpush1.bf16.msra.mxu0 %v2145
  %2536 = vmatprep.subr.bf16.mxu0 0
  %2537 = vmatpush1.bf16.msra.mxu0 %v2146
  %2538 = vmatprep.subr.bf16.mxu0 0
  %2539 = vmatpush1.bf16.msra.mxu0 %v2147
  %2540 = vmatprep.subr.bf16.mxu0 0
  %2541 = vmatpush1.bf16.msra.mxu0 %v2148
  %2542 = vmatprep.subr.bf16.mxu0 0
  %2543 = vmatpush1.bf16.msra.mxu0 %v2149
  %2544 = vmatprep.subr.bf16.mxu0 0
  %2545 = vmatpush1.bf16.msra.mxu0 %v2150
  %2546 = vmatprep.subr.bf16.mxu0 0
  %2547 = vmatpush1.bf16.msra.mxu0 %v2151
  %2548 = vmatprep.subr.bf16.mxu0 0
  %2549 = vmatpush1.bf16.msra.mxu0 %v2152
  %2550 = vmatprep.subr.bf16.mxu0 0
  %2551 = vmatpush1.bf16.msra.mxu0 %v2153
  %2552 = vmatprep.subr.bf16.mxu0 0
  %2553 = vmatpush1.bf16.msra.mxu0 %v2154
  %2554 = vmatprep.subr.bf16.mxu0 0
  %2555 = vmatpush1.bf16.msra.mxu0 %v2155
  %2556 = vmatprep.subr.bf16.mxu0 0
  %2557 = vmatpush1.bf16.msra.mxu0 %v2156
  %2558 = vmatprep.subr.bf16.mxu0 0
  %2559 = vmatpush1.bf16.msra.mxu0 %v2157
  %2560 = vmatprep.subr.bf16.mxu0 0
  %2561 = vmatpush1.bf16.msra.mxu0 %v2158
  %2562 = vmatprep.subr.bf16.mxu0 0
  %2563 = vmatpush1.bf16.msra.mxu0 %v2159
  %2564 = vmatprep.mubr.bf16.mxu0 %v410
  %2565 = vmatmul.mubr.bf16.gmra.mrb[0].mxu0 %v409
  %v2566 = vpop.f32.mrb[0].mxu0
  %v2567 = vadd.f32 %v2502, %v2566
  %v2568 = vpop.f32.mrb[0].mxu0
  %v2569 = vpop.f32.mrb[0].mxu0
  %v2570 = vadd.f32 %v2505, %v2569
  %v2571 = vpop.f32.mrb[0].mxu0
  %2572 = vmatprep.mubr.bf16.mxu0 %v422
  %2573 = vmatmul.mubr.bf16.gmra.mrb[0].mxu0 %v421
  %v2574 = vpop.f32.mrb[0].mxu0
  %v2575 = vadd.f32 %v2510, %v2574
  %v2576 = vpop.f32.mrb[0].mxu0
  %v2577 = vpop.f32.mrb[0].mxu0
  %v2578 = vadd.f32 %v2513, %v2577
  %v2579 = vpop.f32.mrb[0].mxu0
  %2580 = vmatprep.mubr.bf16.mxu0 %v434
  %2581 = vmatmul.mubr.bf16.gmra.mrb[0].mxu0 %v433
  %v2582 = vpop.f32.mrb[0].mxu0
  %v2583 = vadd.f32 %v2518, %v2582
  %v2584 = vpop.f32.mrb[0].mxu0
  %v2585 = vpop.f32.mrb[0].mxu0
  %v2586 = vadd.f32 %v2521, %v2585
  %v2587 = vpop.f32.mrb[0].mxu0
  %2588 = vmatprep.mubr.bf16.mxu0 %v446
  %2589 = vmatmul.mubr.bf16.gmra.mrb[0].mxu0 %v445
  %v2590 = vpop.f32.mrb[0].mxu0
  %v2591 = vadd.f32 %v2526, %v2590
  %v2592 = vpop.f32.mrb[0].mxu0
  %v2593 = vpop.f32.mrb[0].mxu0
  %v2594 = vadd.f32 %v2529, %v2593
  %v2595 = vpop.f32.mrb[0].mxu0
  %2596 = vdwg.mxu0
  %2597 = vmatprep.subr.bf16.mxu0 0
  %2598 = vmatpush1.bf16.msra.mxu0 %v2160
  %2599 = vmatprep.subr.bf16.mxu0 0
  %2600 = vmatpush1.bf16.msra.mxu0 %v2161
  %2601 = vmatprep.subr.bf16.mxu0 0
  %2602 = vmatpush1.bf16.msra.mxu0 %v2162
  %2603 = vmatprep.subr.bf16.mxu0 0
  %2604 = vmatpush1.bf16.msra.mxu0 %v2163
  %2605 = vmatprep.subr.bf16.mxu0 0
  %2606 = vmatpush1.bf16.msra.mxu0 %v2164
  %2607 = vmatprep.subr.bf16.mxu0 0
  %2608 = vmatpush1.bf16.msra.mxu0 %v2165
  %2609 = vmatprep.subr.bf16.mxu0 0
  %2610 = vmatpush1.bf16.msra.mxu0 %v2166
  %2611 = vmatprep.subr.bf16.mxu0 0
  %2612 = vmatpush1.bf16.msra.mxu0 %v2167
  %2613 = vmatprep.subr.bf16.mxu0 0
  %2614 = vmatpush1.bf16.msra.mxu0 %v2168
  %2615 = vmatprep.subr.bf16.mxu0 0
  %2616 = vmatpush1.bf16.msra.mxu0 %v2169
  %2617 = vmatprep.subr.bf16.mxu0 0
  %2618 = vmatpush1.bf16.msra.mxu0 %v2170
  %2619 = vmatprep.subr.bf16.mxu0 0
  %2620 = vmatpush1.bf16.msra.mxu0 %v2171
  %2621 = vmatprep.subr.bf16.mxu0 0
  %2622 = vmatpush1.bf16.msra.mxu0 %v2172
  %2623 = vmatprep.subr.bf16.mxu0 0
  %2624 = vmatpush1.bf16.msra.mxu0 %v2173
  %2625 = vmatprep.subr.bf16.mxu0 0
  %2626 = vmatpush1.bf16.msra.mxu0 %v2174
  %2627 = vmatprep.subr.bf16.mxu0 0
  %2628 = vmatpush1.bf16.msra.mxu0 %v2175
  %2629 = vmatprep.mubr.bf16.mxu0 %v412
  %2630 = vmatmul.mubr.bf16.gmra.mrb[0].mxu0 %v411
  %v2631 = vpop.f32.mrb[0].mxu0
  %v2632 = vadd.f32 %v2567, %v2631
  %v2633 = vpop.f32.mrb[0].mxu0
  %v2634 = vpop.f32.mrb[0].mxu0
  %v2635 = vadd.f32 %v2570, %v2634
  %v2636 = vpop.f32.mrb[0].mxu0
  %2637 = vmatprep.mubr.bf16.mxu0 %v424
  %2638 = vmatmul.mubr.bf16.gmra.mrb[0].mxu0 %v423
  %v2639 = vpop.f32.mrb[0].mxu0
  %v2640 = vadd.f32 %v2575, %v2639
  %v2641 = vpop.f32.mrb[0].mxu0
  %v2642 = vpop.f32.mrb[0].mxu0
  %v2643 = vadd.f32 %v2578, %v2642
  %v2644 = vpop.f32.mrb[0].mxu0
  %2645 = vmatprep.mubr.bf16.mxu0 %v436
  %2646 = vmatmul.mubr.bf16.gmra.mrb[0].mxu0 %v435
  %v2647 = vpop.f32.mrb[0].mxu0
  %v2648 = vadd.f32 %v2583, %v2647
  %v2649 = vpop.f32.mrb[0].mxu0
  %v2650 = vpop.f32.mrb[0].mxu0
  %v2651 = vadd.f32 %v2586, %v2650
  %v2652 = vpop.f32.mrb[0].mxu0
  %2653 = vmatprep.mubr.bf16.mxu0 %v448
  %2654 = vmatmul.mubr.bf16.gmra.mrb[0].mxu0 %v447
  %v2655 = vpop.f32.mrb[0].mxu0
  %v2656 = vadd.f32 %v2591, %v2655
  %v2657 = vpop.f32.mrb[0].mxu0
  %v2658 = vpop.f32.mrb[0].mxu0
  %v2659 = vadd.f32 %v2594, %v2658
  %v2660 = vpop.f32.mrb[0].mxu0
  %2661 = vdwg.mxu0
  %vm2662 = vcmask 261120
  %2663 = vst.msk [vmem:[%s4] sm:$0xff] %vm2662, %v2632
  %2664 = vst.msk [vmem:[%s4 + $0x8] sm:$0xff] %vm2662, %v2635
  %2665 = vst.msk [vmem:[%s4 + $0x10] sm:$0xff] %vm2662, %v2640
  %2666 = vst.msk [vmem:[%s4 + $0x18] sm:$0xff] %vm2662, %v2643
  %2667 = vst.msk [vmem:[%s4 + $0x20] sm:$0xff] %vm2662, %v2648
  %2668 = vst.msk [vmem:[%s4 + $0x28] sm:$0xff] %vm2662, %v2651
  %2669 = vst.msk [vmem:[%s4 + $0x30] sm:$0xff] %vm2662, %v2656
  %2670 = vst.msk [vmem:[%s4 + $0x38] sm:$0xff] %vm2662, %v2659
  // Predicated region
  $region14: #{tpu_custom_call.1} parent=0 // pred_check
    _
  $region15: #{tpu_custom_call.1} parent=0 // pred_check_branch
    %2672 = sbr.rel (0) target = $region17
  $region16: #{tpu_custom_call.1} parent=0 // pred_region
    _
  $region17: #{tpu_custom_call.1} parent=0 // pred_fallthru
    _
  // Predicated region
  $region18: #{tpu_custom_call.1} parent=0 // pred_check
    _
  $region19: #{tpu_custom_call.1} parent=0 // pred_check_branch
    %2674 = sbr.rel (0) target = $region21
  $region20: #{tpu_custom_call.1} parent=0 // pred_region
    _
  $region21: #{tpu_custom_call.1} parent=0 // pred_fallthru
    _
  // Predicated region
  $region22: #{tpu_custom_call.1} parent=0 // pred_check
    _
  $region23: #{tpu_custom_call.1} parent=0 // pred_check_branch
    %2676 = sbr.rel (0) target = $region25
  $region24: #{tpu_custom_call.1} parent=0 // pred_region
    _
  $region25: #{tpu_custom_call.1} parent=0 // pred_fallthru
    _
  // Predicated region
  $region26: #{tpu_custom_call.1} parent=0 // pred_check
    _
  $region27: #{tpu_custom_call.1} parent=0 // pred_check_branch
    %2678 = sbr.rel (0) target = $region29
  $region28: #{tpu_custom_call.1} parent=0 // pred_region
    _
  $region29: #{tpu_custom_call.1} parent=0 // pred_fallthru
    _

</llo_original>
